<compile_context>
chip_gen: v7x
topology: tpu7x:2x2x1
jax: 0.10.0
libtpu: 0.0.40
codegen_flags: <defaults>
</compile_context>

<pallas_src>
import jax
import jax.numpy as jnp
from jax.experimental import pallas as pl
from jax.experimental.pallas import tpu as pltpu


def _round_up(a: int, b: int) -> int:
    return ((a + b - 1) // b) * b


# ---------------------------------------------------------------------------
# One-time parameter preprocessing (hoisted out of the hot path)
# ---------------------------------------------------------------------------

def _dense_conv_weight(w, s_in, s_out, dilation, pad):
    """Densify a dilated Conv1d into a banded matrix acting on the time-major
    flattened activation (flat index = t*C + c).

    w: (H, C_in, K) PyTorch Conv1d weight  ->  (s_in*C_in, s_out*H) f32.
    """
    H, C, K = w.shape
    wt = jnp.transpose(w.astype(jnp.float32), (2, 1, 0))        # (K, C_in, H)
    Wd = jnp.zeros((s_in * C, s_out * H), jnp.float32)
    for u in range(s_out):
        for k in range(K):
            j = u + k * dilation - pad                           # input time index
            if 0 <= j < s_in:                                    # zero padding -> stays 0
                Wd = Wd.at[j * C:(j + 1) * C, u * H:(u + 1) * H].set(wt[k])
    return Wd


def prepare_params(conv_weights, conv_biases, bn_gamma, bn_beta, bn_mean, bn_var,
                   proj_weight, proj_bias, *, eps=1e-5, param_dtype=jnp.float32):
    """Fold the whole eval-mode TCN stack into L+1 (weight, bias-row) pairs.

    conv_weights[i]: (H, C_in_i, K)  PyTorch Conv1d layout
    proj_weight:     (H_out, H*S_L)  PyTorch Linear layout (channel-major flatten)

    Per layer (eval): z = conv(a) + cb ; r = relu(z) ; a' = r*sc + sh  (BN affine).
    The BN affine of layer i is folded into layer i+1's dense weight/bias, so the
    kernel only does: relu(h @ W_i + b_i) per layer and h @ Wp + bp at the end.
    Matmul weights are stored in `param_dtype` (f32 or bf16); bias rows stay f32.
    """
    L = len(conv_weights)
    H, C0, K = conv_weights[0].shape
    dils = [2 ** i for i in range(L)]
    pads = [(K - 1) * d for d in dils]

    H_out, flat = proj_weight.shape
    s_last = flat // H
    assert flat == s_last * H, "projection weight inconsistent with hidden_dim"
    s0 = s_last - sum(pads)
    seq = [s0]
    for p in pads:
        seq.append(seq[-1] + p)
    assert seq[-1] == s_last and s0 > 0

    weights, biases = [], []
    prev_sc = prev_sh = None                                     # previous layer's BN row
    for i in range(L):
        Wd = _dense_conv_weight(conv_weights[i], seq[i], seq[i + 1], dils[i], pads[i])
        b = jnp.tile(conv_biases[i].astype(jnp.float32), seq[i + 1])     # (s_out*H,)
        if i > 0:                                                # fold previous BN affine
            b = b + prev_sh @ Wd
            Wd = prev_sc[:, None] * Wd
        weights.append(Wd.astype(param_dtype))
        biases.append(b.reshape(1, -1).astype(jnp.float32))

        inv = bn_gamma[i].astype(jnp.float32) / jnp.sqrt(bn_var[i].astype(jnp.float32) + eps)
        prev_sc = jnp.tile(inv, seq[i + 1])
        prev_sh = jnp.tile(bn_beta[i].astype(jnp.float32)
                           - bn_mean[i].astype(jnp.float32) * inv, seq[i + 1])

    # PyTorch flattens (H, S_L) channel-major; re-order rows to time-major (t*H + h).
    Wp = jnp.transpose(proj_weight.astype(jnp.float32).reshape(H_out, H, s_last),
                       (2, 1, 0)).reshape(s_last * H, H_out)
    bp = proj_bias.astype(jnp.float32) + prev_sh @ Wp
    Wp = prev_sc[:, None] * Wp
    weights.append(Wp.astype(param_dtype))
    biases.append(bp.reshape(1, H_out).astype(jnp.float32))

    info = {"num_layers": L, "seq_len": s0, "in_channels": C0,
            "hidden": H, "out_dim": H_out}
    return tuple(weights), tuple(biases), info


# ---------------------------------------------------------------------------
# Kernel
# ---------------------------------------------------------------------------

def _make_kernel(num_layers, compute_dtype):
    n_mats = num_layers + 1                                      # L conv layers + projection

    def kernel(*refs):
        x_ref = refs[0]                                          # (TB, S0*C_in) lane-dense
        w_refs = refs[1:1 + n_mats]                              # (F_i, F_{i+1}) dense weights
        b_refs = refs[1 + n_mats:1 + 2 * n_mats]                 # (1, F_{i+1}) f32 bias rows
        o_ref = refs[1 + 2 * n_mats]                             # (TB, H_out)

        h = x_ref[...]
        for i in range(n_mats):
            z = jnp.dot(h.astype(compute_dtype), w_refs[i][...],
                        preferred_element_type=jnp.float32)      # f32 accumulate on MXU
            z = z + b_refs[i][...]                               # single (1,F) broadcast
            h = jnp.maximum(z, 0.0) if i < num_layers else z     # ReLU on conv layers only
        o_ref[...] = h.astype(o_ref.dtype)

    return kernel


def modality_encoder_forward(x, prepared, *, tile_b=512, interpret=False):
    """x: (B, S, C_in) -> (B, hidden_dim) float32."""
    weights, biases, info = prepared
    L = info["num_layers"]
    B, S0, C_in = x.shape
    assert S0 == info["seq_len"] and C_in == info["in_channels"], "x shape mismatch"
    F0 = S0 * C_in
    assert weights[0].shape[0] == F0
    H_out = weights[-1].shape[1]
    compute_dtype = weights[0].dtype

    # Lane-dense input layout: a pure reshape of the contiguous (B, S, C) array,
    # no transpose / channel-pad HBM passes (feedback #4).
    x2 = x.reshape(B, F0)

    # Batch tiling (feedback #5/#7): derive the tile from B, keep >=2 grid steps when
    # possible (v7x megacore + DMA overlap), 8-aligned, minimal padding waste.
    if B <= 8:
        tb = 8
    else:
        n_tiles = max(2, pl.cdiv(B, max(8, tile_b)))
        tb = _round_up(pl.cdiv(B, n_tiles), 8)
    Bp = _round_up(B, tb)
    if Bp != B:
        x2 = jnp.pad(x2, ((0, Bp - B), (0, 0)))
    grid = (Bp // tb,)

    in_specs = [pl.BlockSpec((tb, F0), lambda i: (i, 0))]
    for w in weights:                                            # resident: constant index_map
        in_specs.append(pl.BlockSpec(w.shape, lambda i: (0, 0)))
    for b in biases:
        in_specs.append(pl.BlockSpec(b.shape, lambda i: (0, 0)))

    # VMEM budget computed from actual footprint (feedback #6) instead of a flat 48 MiB.
    param_bytes = sum(int(w.size) * w.dtype.itemsize for w in weights) \
                + sum(int(b.size) * b.dtype.itemsize for b in biases)
    max_f = max(max(int(w.shape[0]), int(w.shape[1])) for w in weights)
    act_bytes = 6 * tb * max_f * 4                               # generous f32 working set
    io_bytes = 2 * tb * F0 * x2.dtype.itemsize + 2 * tb * H_out * 4
    need = param_bytes + act_bytes + io_bytes
    vmem_limit = int(min(60 * 1024 * 1024, max(24 * 1024 * 1024, 2 * need)))

    out = pl.pallas_call(
        _make_kernel(L, compute_dtype),
        out_shape=jax.ShapeDtypeStruct((Bp, H_out), jnp.float32),
        grid=grid,
        in_specs=in_specs,
        out_specs=pl.BlockSpec((tb, H_out), lambda i: (i, 0)),
        compiler_params=pltpu.CompilerParams(
            dimension_semantics=("parallel",),                   # megacore-shardable batch axis
            vmem_limit_bytes=vmem_limit,
        ),
        interpret=interpret,
    )(x2, *weights, *biases)
    return out[:B]


# ---------------------------------------------------------------------------
# Pure-JAX reference (mirrors TCNBlock.forward in eval mode) for validation
# ---------------------------------------------------------------------------

def reference_forward(x, conv_weights, conv_biases, bn_gamma, bn_beta, bn_mean, bn_var,
                      proj_weight, proj_bias, *, kernel_size=3, eps=1e-5):
    h = jnp.transpose(x, (0, 2, 1)).astype(jnp.float32)          # (B, C, S)
    for i, (w, b) in enumerate(zip(conv_weights, conv_biases)):
        d = 2 ** i
        p = (kernel_size - 1) * d
        bsz, _, s = h.shape
        c_out = w.shape[0]
        s_out = s + 2 * p - d * (kernel_size - 1)
        hp = jnp.pad(h, ((0, 0), (0, 0), (p, p)))
        out = jnp.zeros((bsz, c_out, s_out), jnp.float32)
        for k in range(kernel_size):
            seg = hp[:, :, k * d:k * d + s_out]
            out = out + jnp.einsum('oc,bcs->bos', w[:, :, k], seg)
        out = jnp.maximum(out + b[None, :, None], 0.0)
        inv = bn_gamma[i] / jnp.sqrt(bn_var[i] + eps)
        h = (out - bn_mean[i][None, :, None]) * inv[None, :, None] + bn_beta[i][None, :, None]
    flat = h.reshape(h.shape[0], -1)                             # channel-major flatten
    return flat @ proj_weight.T + proj_bias


if __name__ == "__main__":
    # ModalityEncoder config (small, consistent with the module)
    input_dim, hidden_dim, tcn_layers = 4, 32, 2
    kernel_size, sequence_length = 3, 16
    batch = 20  # > 8 so the grid splits into 2 "parallel" tiles; not 8-aligned (ragged path)

    key = jax.random.PRNGKey(0)
    conv_ws, conv_bs = [], []
    bn_g, bn_b, bn_m, bn_v = [], [], [], []
    for i in range(tcn_layers):
        c_in = input_dim if i == 0 else hidden_dim
        key, k1, k2, k3, k4, k5, k6 = jax.random.split(key, 7)
        bound = (c_in * kernel_size) ** -0.5
        conv_ws.append(jax.random.uniform(k1, (hidden_dim, c_in, kernel_size),
                                          jnp.float32, -bound, bound))
        conv_bs.append(jax.random.uniform(k2, (hidden_dim,), jnp.float32, -bound, bound))
        bn_g.append(1.0 + 0.1 * jax.random.normal(k3, (hidden_dim,), jnp.float32))
        bn_b.append(0.1 * jax.random.normal(k4, (hidden_dim,), jnp.float32))
        bn_m.append(0.1 * jax.random.normal(k5, (hidden_dim,), jnp.float32))
        bn_v.append(jax.random.uniform(k6, (hidden_dim,), jnp.float32, 0.5, 1.5))

    s_l = sequence_length + sum((kernel_size - 1) * 2 ** i for i in range(tcn_layers))
    flat_size = hidden_dim * s_l
    key, kw, kb, kx = jax.random.split(key, 4)
    pbound = flat_size ** -0.5
    proj_w = jax.random.uniform(kw, (hidden_dim, flat_size), jnp.float32, -pbound, pbound)
    proj_b = jax.random.uniform(kb, (hidden_dim,), jnp.float32, -pbound, pbound)
    x = jax.random.normal(kx, (batch, sequence_length, input_dim), jnp.float32)

    # f32 path: strict check against the pure-JAX reference.
    prepared = prepare_params(conv_ws, conv_bs, bn_g, bn_b, bn_m, bn_v, proj_w, proj_b)
    out = modality_encoder_forward(x, prepared)
    out = jax.block_until_ready(out)
    ref = reference_forward(x, conv_ws, conv_bs, bn_g, bn_b, bn_m, bn_v, proj_w, proj_b,
                            kernel_size=kernel_size)
    assert out.shape == (batch, hidden_dim)
    assert jnp.allclose(out, ref, atol=1e-3, rtol=1e-3), \
        float(jnp.max(jnp.abs(out - ref)))

    # bf16-operand path (bf16 x and weights on the MXU, f32 accumulate) — smoke test.
    prepared_bf16 = prepare_params(conv_ws, conv_bs, bn_g, bn_b, bn_m, bn_v,
                                   proj_w, proj_b, param_dtype=jnp.bfloat16)
    out_bf16 = modality_encoder_forward(x.astype(jnp.bfloat16), prepared_bf16)
    out_bf16 = jax.block_until_ready(out_bf16)
    assert out_bf16.shape == (batch, hidden_dim)
    assert bool(jnp.all(jnp.isfinite(out_bf16)))

    print("KERNEL_OK")
</pallas_src>

<mosaic_0001>
module attributes {stable_mosaic.version = 11 : i64} {
  func.func @kernel(%arg0: i32, %arg1: memref<16x64xf32, #tpu.memory_space<vmem>>, %arg2: memref<64x576xf32, #tpu.memory_space<vmem>>, %arg3: memref<576x704xf32, #tpu.memory_space<vmem>>, %arg4: memref<704x32xf32, #tpu.memory_space<vmem>>, %arg5: memref<1x576xf32, #tpu.memory_space<vmem>>, %arg6: memref<1x704xf32, #tpu.memory_space<vmem>>, %arg7: memref<1x32xf32, #tpu.memory_space<vmem>>, %arg8: memref<16x32xf32, #tpu.memory_space<vmem>>) attributes {dimension_semantics = [#tpu.dimension_semantics<parallel>], iteration_bounds = array<i64: 2>, scalar_prefetch = 0 : i64, scratch_operands = 0 : i64, tpu.core_type = #tpu.core_type<tc>, window_params = [{transform_indices = @transform_0, window_bounds = array<i64: 16, 64>}, {pipeline_mode = #tpu.pipeline_mode<synchronous>, transform_indices = @transform_1, window_bounds = array<i64: 64, 576>}, {pipeline_mode = #tpu.pipeline_mode<synchronous>, transform_indices = @transform_2, window_bounds = array<i64: 576, 704>}, {pipeline_mode = #tpu.pipeline_mode<synchronous>, transform_indices = @transform_3, window_bounds = array<i64: 704, 32>}, {pipeline_mode = #tpu.pipeline_mode<synchronous>, transform_indices = @transform_4, window_bounds = array<i64: 1, 576>}, {pipeline_mode = #tpu.pipeline_mode<synchronous>, transform_indices = @transform_5, window_bounds = array<i64: 1, 704>}, {pipeline_mode = #tpu.pipeline_mode<synchronous>, transform_indices = @transform_6, window_bounds = array<i64: 1, 32>}, {transform_indices = @transform_7, window_bounds = array<i64: 16, 32>}]} {
    %c0 = arith.constant 0 : index
    %c0_0 = arith.constant 0 : index
    %0 = vector.load %arg1[%c0, %c0_0] : memref<16x64xf32, #tpu.memory_space<vmem>>, vector<16x64xf32>
    %c0_1 = arith.constant 0 : index
    %c0_2 = arith.constant 0 : index
    %1 = vector.load %arg2[%c0_1, %c0_2] : memref<64x576xf32, #tpu.memory_space<vmem>>, vector<64x576xf32>
    %cst = arith.constant dense<0.000000e+00> : vector<16x576xf32>
    %2 = tpu.matmul %0, %1, %cst {dimension_numbers = #tpu.dot_dimension_numbers<[1], [0], [0], [1], [0, 0, 1, 1], [], []>} : vector<16x64xf32>, vector<64x576xf32>, vector<16x576xf32> -> vector<16x576xf32>
    %c0_3 = arith.constant 0 : index
    %c0_4 = arith.constant 0 : index
    %3 = vector.load %arg5[%c0_3, %c0_4] : memref<1x576xf32, #tpu.memory_space<vmem>>, vector<1x576xf32>
    %4 = vector.broadcast %3 : vector<1x576xf32> to vector<16x576xf32>
    %5 = arith.addf %2, %4 : vector<16x576xf32>
    %cst_5 = arith.constant 0.000000e+00 : f32
    %6 = vector.broadcast %cst_5 : f32 to vector<16x576xf32>
    %7 = arith.maximumf %5, %6 : vector<16x576xf32>
    %c0_6 = arith.constant 0 : index
    %c0_7 = arith.constant 0 : index
    %8 = vector.load %arg3[%c0_6, %c0_7] : memref<576x704xf32, #tpu.memory_space<vmem>>, vector<576x704xf32>
    %cst_8 = arith.constant dense<0.000000e+00> : vector<16x704xf32>
    %9 = tpu.matmul %7, %8, %cst_8 {dimension_numbers = #tpu.dot_dimension_numbers<[1], [0], [0], [1], [0, 0, 1, 1], [], []>} : vector<16x576xf32>, vector<576x704xf32>, vector<16x704xf32> -> vector<16x704xf32>
    %c0_9 = arith.constant 0 : index
    %c0_10 = arith.constant 0 : index
    %10 = vector.load %arg6[%c0_9, %c0_10] : memref<1x704xf32, #tpu.memory_space<vmem>>, vector<1x704xf32>
    %11 = vector.broadcast %10 : vector<1x704xf32> to vector<16x704xf32>
    %12 = arith.addf %9, %11 : vector<16x704xf32>
    %cst_11 = arith.constant 0.000000e+00 : f32
    %13 = vector.broadcast %cst_11 : f32 to vector<16x704xf32>
    %14 = arith.maximumf %12, %13 : vector<16x704xf32>
    %c0_12 = arith.constant 0 : index
    %c0_13 = arith.constant 0 : index
    %15 = vector.load %arg4[%c0_12, %c0_13] : memref<704x32xf32, #tpu.memory_space<vmem>>, vector<704x32xf32>
    %cst_14 = arith.constant dense<0.000000e+00> : vector<16x32xf32>
    %16 = tpu.matmul %14, %15, %cst_14 {dimension_numbers = #tpu.dot_dimension_numbers<[1], [0], [0], [1], [0, 0, 1, 1], [], []>} : vector<16x704xf32>, vector<704x32xf32>, vector<16x32xf32> -> vector<16x32xf32>
    %c0_15 = arith.constant 0 : index
    %c0_16 = arith.constant 0 : index
    %17 = vector.load %arg7[%c0_15, %c0_16] : memref<1x32xf32, #tpu.memory_space<vmem>>, vector<1x32xf32>
    %18 = vector.broadcast %17 : vector<1x32xf32> to vector<16x32xf32>
    %19 = arith.addf %16, %18 : vector<16x32xf32>
    %c0_17 = arith.constant 0 : index
    %c0_18 = arith.constant 0 : index
    %20 = vector.load %arg8[%c0_17, %c0_18] : memref<16x32xf32, #tpu.memory_space<vmem>>, vector<16x32xf32>
    tpu.vector_store %arg8[%c0_17, %c0_18], %19 {strides = array<i32>} : memref<16x32xf32, #tpu.memory_space<vmem>>, vector<16x32xf32>,
    return
  }
  func.func @transform_0(%arg0: i32) -> (i32, i32) {
    %c0_i32 = arith.constant 0 : i32
    %c0_i32_0 = arith.constant 0 : i32
    return %arg0, %c0_i32 : i32, i32
  }
  func.func @transform_1(%arg0: i32) -> (i32, i32) {
    %c0_i32 = arith.constant 0 : i32
    %c0_i32_0 = arith.constant 0 : i32
    %c0_i32_1 = arith.constant 0 : i32
    return %c0_i32, %c0_i32_0 : i32, i32
  }
  func.func @transform_2(%arg0: i32) -> (i32, i32) {
    %c0_i32 = arith.constant 0 : i32
    %c0_i32_0 = arith.constant 0 : i32
    %c0_i32_1 = arith.constant 0 : i32
    return %c0_i32, %c0_i32_0 : i32, i32
  }
  func.func @transform_3(%arg0: i32) -> (i32, i32) {
    %c0_i32 = arith.constant 0 : i32
    %c0_i32_0 = arith.constant 0 : i32
    %c0_i32_1 = arith.constant 0 : i32
    return %c0_i32, %c0_i32_0 : i32, i32
  }
  func.func @transform_4(%arg0: i32) -> (i32, i32) {
    %c0_i32 = arith.constant 0 : i32
    %c0_i32_0 = arith.constant 0 : i32
    %c0_i32_1 = arith.constant 0 : i32
    return %c0_i32, %c0_i32_0 : i32, i32
  }
  func.func @transform_5(%arg0: i32) -> (i32, i32) {
    %c0_i32 = arith.constant 0 : i32
    %c0_i32_0 = arith.constant 0 : i32
    %c0_i32_1 = arith.constant 0 : i32
    return %c0_i32, %c0_i32_0 : i32, i32
  }
  func.func @transform_6(%arg0: i32) -> (i32, i32) {
    %c0_i32 = arith.constant 0 : i32
    %c0_i32_0 = arith.constant 0 : i32
    %c0_i32_1 = arith.constant 0 : i32
    return %c0_i32, %c0_i32_0 : i32, i32
  }
  func.func @transform_7(%arg0: i32) -> (i32, i32) {
    %c0_i32 = arith.constant 0 : i32
    %c0_i32_0 = arith.constant 0 : i32
    return %arg0, %c0_i32 : i32, i32
  }
}

</mosaic_0001>

<llo_original>
// kernel: tpu_custom_call.1
$region0: #{tpu_custom_call.1}
  #allocation0 [shape = 'u32[]', space=smem, size = 0x4, offset = 0x4, fixed_abs, tag = 'smem constant byte address 0x4 - core index']
  #allocation1 [shape = 'u32[144,128]{1,0:T(1,128)}', space=vmem, size = 0x12000, scoped, tag = 'internal scratch']
  %s0 = inlined_call_operand.hbm [shape: f32[32,64], index: 0, kind: input, shape index: {}]
  %s1 = inlined_call_operand.hbm [shape: f32[64,576], index: 1, kind: input, shape index: {}]
  %s2 = inlined_call_operand.hbm [shape: f32[576,704], index: 2, kind: input, shape index: {}]
  %s3 = inlined_call_operand.vmem [shape: f32[704,32], index: 3, kind: input, shape index: {}]
  %s4 = inlined_call_operand.hbm [shape: f32[1,576], index: 4, kind: input, shape index: {}]
  %s5 = inlined_call_operand.hbm [shape: f32[1,704], index: 5, kind: input, shape index: {}]
  %s6 = inlined_call_operand.hbm [shape: f32[1,32], index: 6, kind: input, shape index: {}]
  %s7 = inlined_call_operand.hbm [shape: f32[32,32], index: 7, kind: output, shape index: {}]
  %s8 = sld [smem:[#allocation0]]
  $region85: #{tpu_custom_call.1} parent=0
    _
  %s10 = ssub.s32 1, %s8
  %s11 = scalar_select 0, %s10, %s8
  $region1: #{tpu_custom_call.1} parent=0
    #allocation2 [shape = 'u8[16384]{0}', space=vmem, size = 0x4000, scoped, tag = 'input window, operand 0']
    #allocation3 [shape = 's32[2]{0}', space=sflag, size = 0x8, scoped, tag = 'scoped memory for tpu_custom_call.1']
    #allocation4 [shape = 's32[2]{0}', space=sflag, size = 0x8, scoped, tag = 'scoped memory for tpu_custom_call.1']
    #allocation5 [shape = 'u8[163840]{0}', space=vmem, size = 0x28000, scoped, tag = 'input window, operand 1, single buffered']
    #allocation6 [shape = 's32[1]{0}', space=sflag, size = 0x4, scoped, tag = 'scoped memory for tpu_custom_call.1']
    #allocation7 [shape = 'u8[1769472]{0}', space=vmem, size = 0x1b0000, scoped, tag = 'input window, operand 2, single buffered']
    #allocation8 [shape = 'u8[2560]{0}', space=vmem, size = 0xc00, scoped, tag = 'input window, operand 4, single buffered']
    #allocation9 [shape = 's32[1]{0}', space=sflag, size = 0x4, scoped, tag = 'scoped memory for tpu_custom_call.1']
    #allocation10 [shape = 'u8[3072]{0}', space=vmem, size = 0xc00, scoped, tag = 'input window, operand 5, single buffered']
    #allocation11 [shape = 'u8[512]{0}', space=vmem, size = 0x400, scoped, tag = 'input window, operand 6, single buffered']
    #allocation12 [shape = 's32[1]{0}', space=sflag, size = 0x4, scoped, tag = 'scoped memory for tpu_custom_call.1']
    #allocation13 [shape = 'u8[16384]{0}', space=vmem, size = 0x4000, scoped, tag = 'output window, operand 0']
    %12 = vsyncpa [#allocation3], 0
    %s13 = scalar_lea.sflag [#allocation3], 1
    %14 = vsyncpa %s13, 0
    %15 = vsyncpa [#allocation6], 0
    %16 = vsyncpa [#allocation9], 0
    %17 = vsyncpa [#allocation12], 0
    %18 = vsyncpa [#allocation4], 0
    %s19 = scalar_lea.sflag [#allocation4], 1
    %20 = vsyncpa %s19, 0
    loop: start=0, step=1, limit=4
    $region2: #{tpu_custom_call.1} parent=1 // loop_pre_header
      _
    $region3: #{tpu_custom_call.1} parent=1 // loop_header
      %s22 = sphi 0, %s26
      %p23 = scmp.ge.s32.totalorder %s22, 4
      %s32 = sphi 0, %s34
      %s35 = sphi 0, %s32
      %s36 = sphi 0, %s35
      %s52 = sphi 0, %s36
      %s56 = sphi 0, %s56
      %s58 = sphi 0, %s56
      %s59 = sphi 0, %s58
      %s73 = sphi 0, %s59
      %s77 = sphi 0, %s77
      %s79 = sphi 0, %s77
      %s80 = sphi 0, %s79
      %s94 = sphi 0, %s80
      %s98 = sphi 0, %s98
      %s100 = sphi 0, %s98
      %s101 = sphi 0, %s100
      %s115 = sphi 0, %s101
      %s119 = sphi 0, %s119
      %s121 = sphi 0, %s119
      %s122 = sphi 0, %s121
      %s136 = sphi 0, %s122
      %s140 = sphi 0, %s140
      %s142 = sphi 0, %s140
      %s143 = sphi 0, %s142
      %s157 = sphi 0, %s143
      %s161 = sphi 0, %s161
      %s163 = sphi 0, %s161
      %s164 = sphi 0, %s163
      %s178 = sphi 0, %s164
      %s184 = sphi 0, %s186
      %s187 = sphi 0, %s184
      %s188 = sphi 0, %s187
      %s204 = sphi 0, %s188
    $region4: #{tpu_custom_call.1} parent=1 // loop_header_branch
      %25 = sbr.rel (%p23) target = $region8
    $region5: #{tpu_custom_call.1} parent=1 // loop_body
      %s27 = ssub.s32 %s22, 1
      %s28 = ssub.s32 %s22, 2
      %s29 = sadd.s32 %s22, 1
      %s30 = ssub.s32 %s22, %s29
      %p31 = scmp.eq.s32.totalorder %s30, 0
      %s33 = sadd.s32 %s32, 1
      %s34 = scalar_select %p31, %s32, %s33
      %p37 = pneg %p31
      %p38 = scmp.eq.s32.totalorder %s22, 1
      %p39 = por %p37, %p38
      %p40 = scmp.ne.s32.totalorder %s32, %s35
      %p41 = scmp.eq.s32.totalorder %s22, 0
      %p42 = por %p40, %p41
      %p43 = scmp.ne.s32.totalorder %s32, %s35
      %p44 = scmp.eq.s32.totalorder %s27, 1
      %p45 = por %p43, %p44
      %p46 = scmp.ne.s32.totalorder %s35, %s36
      %p47 = scmp.eq.s32.totalorder %s27, 0
      %p48 = por %p46, %p47
      %p49 = scmp.ne.s32.totalorder %s35, %s36
      %p50 = scmp.eq.s32.totalorder %s28, 1
      %p51 = por %p49, %p50
      %p53 = scmp.ne.s32.totalorder %s36, %s52
      %p54 = scmp.eq.s32.totalorder %s28, 0
      %p55 = por %p53, %p54
      %s57 = sadd.s32 %s56, 1
      %p60 = scmp.eq.s32.totalorder %s22, 1
      %p61 = scmp.ne.s32.totalorder %s56, %s58
      %p62 = scmp.eq.s32.totalorder %s22, 0
      %p63 = por %p61, %p62
      %p64 = scmp.ne.s32.totalorder %s56, %s58
      %p65 = scmp.eq.s32.totalorder %s27, 1
      %p66 = por %p64, %p65
      %p67 = scmp.ne.s32.totalorder %s58, %s59
      %p68 = scmp.eq.s32.totalorder %s27, 0
      %p69 = por %p67, %p68
      %p70 = scmp.ne.s32.totalorder %s58, %s59
      %p71 = scmp.eq.s32.totalorder %s28, 1
      %p72 = por %p70, %p71
      %p74 = scmp.ne.s32.totalorder %s59, %s73
      %p75 = scmp.eq.s32.totalorder %s28, 0
      %p76 = por %p74, %p75
      %s78 = sadd.s32 %s77, 1
      %p81 = scmp.eq.s32.totalorder %s22, 1
      %p82 = scmp.ne.s32.totalorder %s77, %s79
      %p83 = scmp.eq.s32.totalorder %s22, 0
      %p84 = por %p82, %p83
      %p85 = scmp.ne.s32.totalorder %s77, %s79
      %p86 = scmp.eq.s32.totalorder %s27, 1
      %p87 = por %p85, %p86
      %p88 = scmp.ne.s32.totalorder %s79, %s80
      %p89 = scmp.eq.s32.totalorder %s27, 0
      %p90 = por %p88, %p89
      %p91 = scmp.ne.s32.totalorder %s79, %s80
      %p92 = scmp.eq.s32.totalorder %s28, 1
      %p93 = por %p91, %p92
      %p95 = scmp.ne.s32.totalorder %s80, %s94
      %p96 = scmp.eq.s32.totalorder %s28, 0
      %p97 = por %p95, %p96
      %s99 = sadd.s32 %s98, 1
      %p102 = scmp.eq.s32.totalorder %s22, 1
      %p103 = scmp.ne.s32.totalorder %s98, %s100
      %p104 = scmp.eq.s32.totalorder %s22, 0
      %p105 = por %p103, %p104
      %p106 = scmp.ne.s32.totalorder %s98, %s100
      %p107 = scmp.eq.s32.totalorder %s27, 1
      %p108 = por %p106, %p107
      %p109 = scmp.ne.s32.totalorder %s100, %s101
      %p110 = scmp.eq.s32.totalorder %s27, 0
      %p111 = por %p109, %p110
      %p112 = scmp.ne.s32.totalorder %s100, %s101
      %p113 = scmp.eq.s32.totalorder %s28, 1
      %p114 = por %p112, %p113
      %p116 = scmp.ne.s32.totalorder %s101, %s115
      %p117 = scmp.eq.s32.totalorder %s28, 0
      %p118 = por %p116, %p117
      %s120 = sadd.s32 %s119, 1
      %p123 = scmp.eq.s32.totalorder %s22, 1
      %p124 = scmp.ne.s32.totalorder %s119, %s121
      %p125 = scmp.eq.s32.totalorder %s22, 0
      %p126 = por %p124, %p125
      %p127 = scmp.ne.s32.totalorder %s119, %s121
      %p128 = scmp.eq.s32.totalorder %s27, 1
      %p129 = por %p127, %p128
      %p130 = scmp.ne.s32.totalorder %s121, %s122
      %p131 = scmp.eq.s32.totalorder %s27, 0
      %p132 = por %p130, %p131
      %p133 = scmp.ne.s32.totalorder %s121, %s122
      %p134 = scmp.eq.s32.totalorder %s28, 1
      %p135 = por %p133, %p134
      %p137 = scmp.ne.s32.totalorder %s122, %s136
      %p138 = scmp.eq.s32.totalorder %s28, 0
      %p139 = por %p137, %p138
      %s141 = sadd.s32 %s140, 1
      %p144 = scmp.eq.s32.totalorder %s22, 1
      %p145 = scmp.ne.s32.totalorder %s140, %s142
      %p146 = scmp.eq.s32.totalorder %s22, 0
      %p147 = por %p145, %p146
      %p148 = scmp.ne.s32.totalorder %s140, %s142
      %p149 = scmp.eq.s32.totalorder %s27, 1
      %p150 = por %p148, %p149
      %p151 = scmp.ne.s32.totalorder %s142, %s143
      %p152 = scmp.eq.s32.totalorder %s27, 0
      %p153 = por %p151, %p152
      %p154 = scmp.ne.s32.totalorder %s142, %s143
      %p155 = scmp.eq.s32.totalorder %s28, 1
      %p156 = por %p154, %p155
      %p158 = scmp.ne.s32.totalorder %s143, %s157
      %p159 = scmp.eq.s32.totalorder %s28, 0
      %p160 = por %p158, %p159
      %s162 = sadd.s32 %s161, 1
      %p165 = scmp.eq.s32.totalorder %s22, 1
      %p166 = scmp.ne.s32.totalorder %s161, %s163
      %p167 = scmp.eq.s32.totalorder %s22, 0
      %p168 = por %p166, %p167
      %p169 = scmp.ne.s32.totalorder %s161, %s163
      %p170 = scmp.eq.s32.totalorder %s27, 1
      %p171 = por %p169, %p170
      %p172 = scmp.ne.s32.totalorder %s163, %s164
      %p173 = scmp.eq.s32.totalorder %s27, 0
      %p174 = por %p172, %p173
      %p175 = scmp.ne.s32.totalorder %s163, %s164
      %p176 = scmp.eq.s32.totalorder %s28, 1
      %p177 = por %p175, %p176
      %p179 = scmp.ne.s32.totalorder %s164, %s178
      %p180 = scmp.eq.s32.totalorder %s28, 0
      %p181 = por %p179, %p180
      %s182 = ssub.s32 %s22, %s29
      %p183 = scmp.eq.s32.totalorder %s182, 0
      %s185 = sadd.s32 %s184, 1
      %s186 = scalar_select %p183, %s184, %s185
      %p189 = pneg %p183
      %p190 = scmp.eq.s32.totalorder %s22, 1
      %p191 = por %p189, %p190
      %p192 = scmp.ne.s32.totalorder %s184, %s187
      %p193 = scmp.eq.s32.totalorder %s22, 0
      %p194 = por %p192, %p193
      %p195 = scmp.ne.s32.totalorder %s184, %s187
      %p196 = scmp.eq.s32.totalorder %s27, 1
      %p197 = por %p195, %p196
      %p198 = scmp.ne.s32.totalorder %s187, %s188
      %p199 = scmp.eq.s32.totalorder %s27, 0
      %p200 = por %p198, %p199
      %p201 = scmp.ne.s32.totalorder %s187, %s188
      %p202 = scmp.eq.s32.totalorder %s28, 1
      %p203 = por %p201, %p202
      %p205 = scmp.ne.s32.totalorder %s188, %s204
      %p206 = scmp.eq.s32.totalorder %s28, 0
      %p207 = por %p205, %p206
      %p208 = scmp.le.s32.totalorder 1, %s22
      %p209 = scmp.lt.s32.totalorder %s22, 3
      %p210 = pnand %p208, %p209
      %p211 = pneg %p210
      // Predicated region
      $region9: #{tpu_custom_call.1} parent=5 // pred_check
        _
      $region10: #{tpu_custom_call.1} parent=5 // pred_check_branch
        %213 = sbr.rel (%p210) target = $region12
      $region11: #{tpu_custom_call.1} parent=5 // pred_region
        %s214 = ssub.s32 %s22, 1
        // Predicated region
        $region13: #{tpu_custom_call.1} parent=11 // pred_check
          %p215 = pneg %p69
        $region14: #{tpu_custom_call.1} parent=11 // pred_check_branch
          %217 = sbr.rel (%p215) target = $region16
        $region15: #{tpu_custom_call.1} parent=11 // pred_region
          %s219 = ssub.s32 5120, 5120
          %220 = vsyncadd [#allocation6], %s219
          %s221 = sshll.u32 [#allocation5], 4
          %s222 = int_to_ptr.vmem [resolvable:$true] %s221
          %227 = dma.hbm_to_vmem [thread:$0]  %s1, 5120, %s222, [#allocation6], 640, 640, 40
        $region16: #{tpu_custom_call.1} parent=11 // pred_fallthru
          _
        // Predicated region
        $region17: #{tpu_custom_call.1} parent=11 // pred_check
          %p228 = pneg %p90
        $region18: #{tpu_custom_call.1} parent=11 // pred_check_branch
          %230 = sbr.rel (%p228) target = $region20
        $region19: #{tpu_custom_call.1} parent=11 // pred_region
          %s232 = ssub.s32 55296, 55296
          %233 = vsyncadd [#allocation6], %s232
          %s234 = sshll.u32 [#allocation7], 4
          %s235 = int_to_ptr.vmem [resolvable:$true] %s234
          %240 = dma.hbm_to_vmem [thread:$0]  %s2, 55296, %s235, [#allocation6], 768, 768, 48
        $region20: #{tpu_custom_call.1} parent=11 // pred_fallthru
          _
        // Predicated region
        $region21: #{tpu_custom_call.1} parent=11 // pred_check
          %p241 = pneg %p111
        $region22: #{tpu_custom_call.1} parent=11 // pred_check_branch
          %243 = sbr.rel (%p241) target = $region24
        $region23: #{tpu_custom_call.1} parent=11 // pred_region
          _
        $region24: #{tpu_custom_call.1} parent=11 // pred_fallthru
          _
        // Predicated region
        $region25: #{tpu_custom_call.1} parent=11 // pred_check
          %p244 = pneg %p132
        $region26: #{tpu_custom_call.1} parent=11 // pred_check_branch
          %246 = sbr.rel (%p244) target = $region28
        $region27: #{tpu_custom_call.1} parent=11 // pred_region
          %s248 = ssub.s32 80, 80
          %249 = vsyncadd [#allocation9], %s248
          %s251 = sshll.u32 [#allocation8], 4
          %s252 = int_to_ptr.vmem [resolvable:$true] %s251
          %254 = dma.hbm_to_vmem [thread:$0]  %s4, 80, %s252, [#allocation9]
        $region28: #{tpu_custom_call.1} parent=11 // pred_fallthru
          _
        // Predicated region
        $region29: #{tpu_custom_call.1} parent=11 // pred_check
          %p255 = pneg %p153
        $region30: #{tpu_custom_call.1} parent=11 // pred_check_branch
          %257 = sbr.rel (%p255) target = $region32
        $region31: #{tpu_custom_call.1} parent=11 // pred_region
          %s259 = ssub.s32 96, 96
          %260 = vsyncadd [#allocation9], %s259
          %s262 = sshll.u32 [#allocation10], 4
          %s263 = int_to_ptr.vmem [resolvable:$true] %s262
          %265 = dma.hbm_to_vmem [thread:$0]  %s5, 96, %s263, [#allocation9]
        $region32: #{tpu_custom_call.1} parent=11 // pred_fallthru
          _
        // Predicated region
        $region33: #{tpu_custom_call.1} parent=11 // pred_check
          %p266 = pneg %p174
        $region34: #{tpu_custom_call.1} parent=11 // pred_check_branch
          %268 = sbr.rel (%p266) target = $region36
        $region35: #{tpu_custom_call.1} parent=11 // pred_region
          %s270 = ssub.s32 16, 16
          %271 = vsyncadd [#allocation12], %s270
          %s273 = sshll.u32 [#allocation11], 4
          %s274 = int_to_ptr.vmem [resolvable:$true] %s273
          %276 = dma.hbm_to_vmem [thread:$0]  %s6, 16, %s274, [#allocation12]
        $region36: #{tpu_custom_call.1} parent=11 // pred_fallthru
          _
      $region12: #{tpu_custom_call.1} parent=5 // pred_fallthru
        _
      %p277 = scmp.lt.s32.totalorder %s22, 2
      // Predicated region
      $region37: #{tpu_custom_call.1} parent=5 // pred_check
        %p278 = pneg %p277
      $region38: #{tpu_custom_call.1} parent=5 // pred_check_branch
        %280 = sbr.rel (%p278) target = $region40
      $region39: #{tpu_custom_call.1} parent=5 // pred_region
        // Predicated region
        $region41: #{tpu_custom_call.1} parent=39 // pred_check
          %p281 = pneg %p42
        $region42: #{tpu_custom_call.1} parent=39 // pred_check_branch
          %283 = sbr.rel (%p281) target = $region44
        $region43: #{tpu_custom_call.1} parent=39 // pred_region
          %s284 = sand.u32 %s32, 1
          %s285 = scalar_lea.sflag [#allocation3], %s284
          %s286 = sand.u32 %s32, 1
          %s287 = smul.addr %s286, 16
          %s288 = scalar_lea.vmem [#allocation2], %s287
          %s289 = smul.u32 2, %s22
          %s291 = ssub.s32 256, 256
          %292 = vsyncadd %s285, %s291
          %s293 = smul.addr %s289, 128
          %s294 = scalar_lea.hbm %s0, %s293
          %s295 = sshll.u32 %s288, 4
          %s296 = int_to_ptr.vmem [resolvable:$true] %s295
          %301 = dma.hbm_to_vmem [thread:$0]  %s294, 256, %s296, %s285, 128, 128, 8
        $region44: #{tpu_custom_call.1} parent=39 // pred_fallthru
          _
      $region40: #{tpu_custom_call.1} parent=5 // pred_fallthru
        _
      %p302 = scmp.le.s32.totalorder 1, %s22
      %p303 = scmp.lt.s32.totalorder %s22, 3
      %p304 = pnand %p302, %p303
      %p305 = pneg %p304
      // Predicated region
      $region45: #{tpu_custom_call.1} parent=5 // pred_check
        _
      $region46: #{tpu_custom_call.1} parent=5 // pred_check_branch
        %307 = sbr.rel (%p304) target = $region48
      $region47: #{tpu_custom_call.1} parent=5 // pred_region
        %s308 = ssub.s32 %s22, 1
        %s309 = sand.u32 %s35, 1
        %s310 = scalar_lea.sflag [#allocation3], %s309
        %s311 = sand.u32 %s35, 1
        %s312 = smul.addr %s311, 16
        %s313 = scalar_lea.vmem [#allocation2], %s312
        // Predicated region
        $region49: #{tpu_custom_call.1} parent=47 // pred_check
          %p314 = pneg %p48
        $region50: #{tpu_custom_call.1} parent=47 // pred_check_branch
          %316 = sbr.rel (%p314) target = $region52
        $region51: #{tpu_custom_call.1} parent=47 // pred_region
          %317 = dma.done %s310, 256
        $region52: #{tpu_custom_call.1} parent=47 // pred_fallthru
          _
        // Predicated region
        $region53: #{tpu_custom_call.1} parent=47 // pred_check
          %p318 = pneg %p69
        $region54: #{tpu_custom_call.1} parent=47 // pred_check_branch
          %320 = sbr.rel (%p318) target = $region56
        $region55: #{tpu_custom_call.1} parent=47 // pred_region
          %321 = dma.done [#allocation6], 5120
        $region56: #{tpu_custom_call.1} parent=47 // pred_fallthru
          _
        // Predicated region
        $region57: #{tpu_custom_call.1} parent=47 // pred_check
          %p322 = pneg %p90
        $region58: #{tpu_custom_call.1} parent=47 // pred_check_branch
          %324 = sbr.rel (%p322) target = $region60
        $region59: #{tpu_custom_call.1} parent=47 // pred_region
          %325 = dma.done [#allocation6], 55296
        $region60: #{tpu_custom_call.1} parent=47 // pred_fallthru
          _
        // Predicated region
        $region61: #{tpu_custom_call.1} parent=47 // pred_check
          %p326 = pneg %p132
        $region62: #{tpu_custom_call.1} parent=47 // pred_check_branch
          %328 = sbr.rel (%p326) target = $region64
        $region63: #{tpu_custom_call.1} parent=47 // pred_region
          %329 = dma.done [#allocation9], 80
        $region64: #{tpu_custom_call.1} parent=47 // pred_fallthru
          _
        // Predicated region
        $region65: #{tpu_custom_call.1} parent=47 // pred_check
          %p330 = pneg %p153
        $region66: #{tpu_custom_call.1} parent=47 // pred_check_branch
          %332 = sbr.rel (%p330) target = $region68
        $region67: #{tpu_custom_call.1} parent=47 // pred_region
          %333 = dma.done [#allocation9], 96
        $region68: #{tpu_custom_call.1} parent=47 // pred_fallthru
          _
        // Predicated region
        $region69: #{tpu_custom_call.1} parent=47 // pred_check
          %p334 = pneg %p174
        $region70: #{tpu_custom_call.1} parent=47 // pred_check_branch
          %336 = sbr.rel (%p334) target = $region72
        $region71: #{tpu_custom_call.1} parent=47 // pred_region
          %337 = dma.done [#allocation12], 16
        $region72: #{tpu_custom_call.1} parent=47 // pred_fallthru
          _
        %s338 = sand.u32 %s35, 1
        %s339 = scalar_lea.sflag [#allocation3], %s338
        %s340 = sand.u32 %s35, 1
        %s341 = smul.addr %s340, 16
        %s342 = scalar_lea.vmem [#allocation2], %s341
        %p343 = pneg %p48
        %p344 = pneg %p45
        %p345 = pneg %p69
        %p346 = pneg %p66
        %p347 = pneg %p90
        %p348 = pneg %p87
        %p349 = pneg %p111
        %p350 = pneg %p108
        %p351 = pneg %p132
        %p352 = pneg %p129
        %p353 = pneg %p153
        %p354 = pneg %p150
        %p355 = pneg %p174
        %p356 = pneg %p171
        %p357 = pneg %p200
        %p358 = pneg %p197
        %s359 = sand.u32 %s187, 1
        %s360 = scalar_lea.sflag [#allocation4], %s359
        %s361 = sand.u32 %s187, 1
        %s362 = smul.addr %s361, 16
        %s363 = scalar_lea.vmem [#allocation13], %s362
        %s364 = smul.u32 2, %s27
        %s365 = smul.u32 2, %s27
        %v366 = vld [vmem:[%s313] sm:$0xff]
        %v367 = vld [vmem:[%s313 + $0x8] sm:$0xff]
        %v368 = vld [vmem:[#allocation5] sm:$0xff]
        %v369 = vld [vmem:[#allocation5 + $0x8] sm:$0xff]
        %v370 = vld [vmem:[#allocation5 + $0x10] sm:$0xff]
        %v371 = vld [vmem:[#allocation5 + $0x18] sm:$0xff]
        %v372 = vld [vmem:[#allocation5 + $0x20] sm:$0xff]
        %v373 = vld [vmem:[#allocation5 + $0x28] sm:$0xff]
        %v374 = vld [vmem:[#allocation5 + $0x30] sm:$0xff]
        %v375 = vld [vmem:[#allocation5 + $0x38] sm:$0xff]
        %v376 = vld [vmem:[#allocation5 + $0x40] sm:$0xff]
        %v377 = vld [vmem:[#allocation5 + $0x48] sm:$0xff]
        %v378 = vld [vmem:[#allocation5 + $0x50] sm:$0xff]
        %v379 = vld [vmem:[#allocation5 + $0x58] sm:$0xff]
        %v380 = vld [vmem:[#allocation5 + $0x60] sm:$0xff]
        %v381 = vld [vmem:[#allocation5 + $0x68] sm:$0xff]
        %v382 = vld [vmem:[#allocation5 + $0x70] sm:$0xff]
        %v383 = vld [vmem:[#allocation5 + $0x78] sm:$0xff]
        %v384 = vld [vmem:[#allocation5 + $0x80] sm:$0xff]
        %v385 = vld [vmem:[#allocation5 + $0x88] sm:$0xff]
        %v386 = vld [vmem:[#allocation5 + $0x90] sm:$0xff]
        %v387 = vld [vmem:[#allocation5 + $0x98] sm:$0xff]
        %v388 = vld [vmem:[#allocation5 + $0xa0] sm:$0xff]
        %v389 = vld [vmem:[#allocation5 + $0xa8] sm:$0xff]
        %v390 = vld [vmem:[#allocation5 + $0xb0] sm:$0xff]
        %v391 = vld [vmem:[#allocation5 + $0xb8] sm:$0xff]
        %v392 = vld [vmem:[#allocation5 + $0xc0] sm:$0xff]
        %v393 = vld [vmem:[#allocation5 + $0xc8] sm:$0xff]
        %v394 = vld [vmem:[#allocation5 + $0xd0] sm:$0xff]
        %v395 = vld [vmem:[#allocation5 + $0xd8] sm:$0xff]
        %v396 = vld [vmem:[#allocation5 + $0xe0] sm:$0xff]
        %v397 = vld [vmem:[#allocation5 + $0xe8] sm:$0xff]
        %v398 = vld [vmem:[#allocation5 + $0xf0] sm:$0xff]
        %v399 = vld [vmem:[#allocation5 + $0xf8] sm:$0xff]
        %v400 = vld [vmem:[#allocation5 + $0x100] sm:$0xff]
        %v401 = vld [vmem:[#allocation5 + $0x108] sm:$0xff]
        %v402 = vld [vmem:[#allocation5 + $0x110] sm:$0xff]
        %v403 = vld [vmem:[#allocation5 + $0x118] sm:$0xff]
        %v404 = vld [vmem:[#allocation5 + $0x120] sm:$0xff]
        %v405 = vld [vmem:[#allocation5 + $0x128] sm:$0xff]
        %v406 = vld [vmem:[#allocation5 + $0x130] sm:$0xff]
        %v407 = vld [vmem:[#allocation5 + $0x138] sm:$0xff]
        %v408 = vld [vmem:[#allocation8] sm:$0x1f]
        %v410 = vlaneseq
        %v411 = vshrl.u32 %v410, 7
        %v412 = vsub.s32 0, %v411
        %v413 = vrot.slane %v408, %v412
        %v414 = vlaneseq
        %v415 = vshrl.u32 %v414, 7
        %v416 = vsub.s32 1, %v415
        %v417 = vrot.slane %v408, %v416
        %v418 = vlaneseq
        %v419 = vshrl.u32 %v418, 7
        %v420 = vsub.s32 2, %v419
        %v421 = vrot.slane %v408, %v420
        %v422 = vlaneseq
        %v423 = vshrl.u32 %v422, 7
        %v424 = vsub.s32 3, %v423
        %v425 = vrot.slane %v408, %v424
        %v426 = vlaneseq
        %v427 = vshrl.u32 %v426, 7
        %v428 = vsub.s32 4, %v427
        %v429 = vrot.slane %v408, %v428
        %vm435 = vcmask 523264
        %v437 = vsel %vm435, %v366, 0
        %v440 = vsel %vm435, %v367, 0
        %442 = vmatprep.subr.mxu0 %v369
        %443 = vmatpush1.msra.mxu0 %v368
        %444 = vmatprep.subr.mxu0 %v374
        %445 = vmatpush1.msra.mxu0 %v373
        %446 = vmatprep.subr.mxu0 %v379
        %447 = vmatpush1.msra.mxu0 %v378
        %448 = vmatprep.subr.mxu0 %v384
        %449 = vmatpush1.msra.mxu0 %v383
        %450 = vmatprep.subr.mxu0 %v389
        %451 = vmatpush1.msra.mxu0 %v388
        %452 = vmatprep.subr.mxu0 %v394
        %453 = vmatpush1.msra.mxu0 %v393
        %454 = vmatprep.subr.mxu0 %v399
        %455 = vmatpush1.msra.mxu0 %v398
        %456 = vmatprep.subr.mxu0 %v404
        %457 = vmatpush1.msra.mxu0 %v403
        %458 = vmatprep.subr.mxu0 0.0
        %459 = vmatpush1.msra.mxu0 0.0
        %460 = vmatprep.subr.mxu0 0.0
        %461 = vmatpush1.msra.mxu0 0.0
        %462 = vmatprep.subr.mxu0 0.0
        %463 = vmatpush1.msra.mxu0 0.0
        %464 = vmatprep.subr.mxu0 0.0
        %465 = vmatpush1.msra.mxu0 0.0
        %466 = vmatprep.subr.mxu0 0.0
        %467 = vmatpush1.msra.mxu0 0.0
        %468 = vmatprep.subr.mxu0 0.0
        %469 = vmatpush1.msra.mxu0 0.0
        %470 = vmatprep.subr.mxu0 0.0
        %471 = vmatpush1.msra.mxu0 0.0
        %472 = vmatprep.subr.mxu0 0.0
        %473 = vmatpush1.msra.mxu0 0.0
        %474 = vmatprep.subr.mxu0 0.0
        %475 = vmatpush1.msra.mxu0 0.0
        %476 = vmatprep.subr.mxu0 0.0
        %477 = vmatpush1.msra.mxu0 0.0
        %478 = vmatprep.subr.mxu0 0.0
        %479 = vmatpush1.msra.mxu0 0.0
        %480 = vmatprep.subr.mxu0 0.0
        %481 = vmatpush1.msra.mxu0 0.0
        %482 = vmatprep.subr.mxu0 0.0
        %483 = vmatpush1.msra.mxu0 0.0
        %484 = vmatprep.subr.mxu0 0.0
        %485 = vmatpush1.msra.mxu0 0.0
        %486 = vmatprep.subr.mxu0 0.0
        %487 = vmatpush1.msra.mxu0 0.0
        %488 = vmatprep.subr.mxu0 0.0
        %489 = vmatpush1.msra.mxu0 0.0
        %490 = vmatprep.subr.mxu0 0.0
        %491 = vmatpush1.msra.mxu0 0.0
        %492 = vmatprep.subr.mxu0 0.0
        %493 = vmatpush1.msra.mxu0 0.0
        %494 = vmatprep.subr.mxu0 0.0
        %495 = vmatpush1.msra.mxu0 0.0
        %496 = vmatprep.subr.mxu0 0.0
        %497 = vmatpush1.msra.mxu0 0.0
        %498 = vmatprep.subr.mxu0 0.0
        %499 = vmatpush1.msra.mxu0 0.0
        %500 = vmatprep.subr.mxu0 0.0
        %501 = vmatpush1.msra.mxu0 0.0
        %502 = vmatprep.subr.mxu0 0.0
        %503 = vmatpush1.msra.mxu0 0.0
        %504 = vmatprep.subr.mxu0 0.0
        %505 = vmatpush1.msra.mxu0 0.0
        %506 = vmatprep.mubr.f32.mxu0 0.0
        %507 = vmatmul.mubr.f32.gmra.mrb[0].mxu0 %v437
        %v508 = vpop.f32.mrb[0].mxu0
        %v509 = vadd.f32 %v413, %v508
        %v510 = vpop.f32.mrb[0].mxu0
        %v511 = vadd.f32 %v417, %v510
        %512 = vmatprep.mubr.f32.mxu0 0.0
        %513 = vmatmul.mubr.f32.gmra.mrb[0].mxu0 %v440
        %v514 = vpop.f32.mrb[0].mxu0
        %v515 = vadd.f32 %v413, %v514
        %v516 = vpop.f32.mrb[0].mxu0
        %v517 = vadd.f32 %v417, %v516
        %518 = vdwg.mxu0
        %519 = vmatprep.subr.mxu0 %v371
        %520 = vmatpush1.msra.mxu0 %v370
        %521 = vmatprep.subr.mxu0 %v376
        %522 = vmatpush1.msra.mxu0 %v375
        %523 = vmatprep.subr.mxu0 %v381
        %524 = vmatpush1.msra.mxu0 %v380
        %525 = vmatprep.subr.mxu0 %v386
        %526 = vmatpush1.msra.mxu0 %v385
        %527 = vmatprep.subr.mxu0 %v391
        %528 = vmatpush1.msra.mxu0 %v390
        %529 = vmatprep.subr.mxu0 %v396
        %530 = vmatpush1.msra.mxu0 %v395
        %531 = vmatprep.subr.mxu0 %v401
        %532 = vmatpush1.msra.mxu0 %v400
        %533 = vmatprep.subr.mxu0 %v406
        %534 = vmatpush1.msra.mxu0 %v405
        %535 = vmatprep.subr.mxu0 0.0
        %536 = vmatpush1.msra.mxu0 0.0
        %537 = vmatprep.subr.mxu0 0.0
        %538 = vmatpush1.msra.mxu0 0.0
        %539 = vmatprep.subr.mxu0 0.0
        %540 = vmatpush1.msra.mxu0 0.0
        %541 = vmatprep.subr.mxu0 0.0
        %542 = vmatpush1.msra.mxu0 0.0
        %543 = vmatprep.subr.mxu0 0.0
        %544 = vmatpush1.msra.mxu0 0.0
        %545 = vmatprep.subr.mxu0 0.0
        %546 = vmatpush1.msra.mxu0 0.0
        %547 = vmatprep.subr.mxu0 0.0
        %548 = vmatpush1.msra.mxu0 0.0
        %549 = vmatprep.subr.mxu0 0.0
        %550 = vmatpush1.msra.mxu0 0.0
        %551 = vmatprep.subr.mxu0 0.0
        %552 = vmatpush1.msra.mxu0 0.0
        %553 = vmatprep.subr.mxu0 0.0
        %554 = vmatpush1.msra.mxu0 0.0
        %555 = vmatprep.subr.mxu0 0.0
        %556 = vmatpush1.msra.mxu0 0.0
        %557 = vmatprep.subr.mxu0 0.0
        %558 = vmatpush1.msra.mxu0 0.0
        %559 = vmatprep.subr.mxu0 0.0
        %560 = vmatpush1.msra.mxu0 0.0
        %561 = vmatprep.subr.mxu0 0.0
        %562 = vmatpush1.msra.mxu0 0.0
        %563 = vmatprep.subr.mxu0 0.0
        %564 = vmatpush1.msra.mxu0 0.0
        %565 = vmatprep.subr.mxu0 0.0
        %566 = vmatpush1.msra.mxu0 0.0
        %567 = vmatprep.subr.mxu0 0.0
        %568 = vmatpush1.msra.mxu0 0.0
        %569 = vmatprep.subr.mxu0 0.0
        %570 = vmatpush1.msra.mxu0 0.0
        %571 = vmatprep.subr.mxu0 0.0
        %572 = vmatpush1.msra.mxu0 0.0
        %573 = vmatprep.subr.mxu0 0.0
        %574 = vmatpush1.msra.mxu0 0.0
        %575 = vmatprep.subr.mxu0 0.0
        %576 = vmatpush1.msra.mxu0 0.0
        %577 = vmatprep.subr.mxu0 0.0
        %578 = vmatpush1.msra.mxu0 0.0
        %579 = vmatprep.subr.mxu0 0.0
        %580 = vmatpush1.msra.mxu0 0.0
        %581 = vmatprep.subr.mxu0 0.0
        %582 = vmatpush1.msra.mxu0 0.0
        %583 = vmatprep.mubr.f32.mxu0 0.0
        %584 = vmatmul.mubr.f32.gmra.mrb[0].mxu0 %v437
        %v585 = vpop.f32.mrb[0].mxu0
        %v586 = vadd.f32 %v421, %v585
        %v587 = vpop.f32.mrb[0].mxu0
        %v588 = vadd.f32 %v425, %v587
        %589 = vmatprep.mubr.f32.mxu0 0.0
        %590 = vmatmul.mubr.f32.gmra.mrb[0].mxu0 %v440
        %v591 = vpop.f32.mrb[0].mxu0
        %v592 = vadd.f32 %v421, %v591
        %v593 = vpop.f32.mrb[0].mxu0
        %v594 = vadd.f32 %v425, %v593
        %595 = vdwg.mxu0
        %596 = vmatprep.subr.mxu0 0.0
        %597 = vmatpush1.msra.mxu0 %v372
        %598 = vmatprep.subr.mxu0 0.0
        %599 = vmatpush1.msra.mxu0 %v377
        %600 = vmatprep.subr.mxu0 0.0
        %601 = vmatpush1.msra.mxu0 %v382
        %602 = vmatprep.subr.mxu0 0.0
        %603 = vmatpush1.msra.mxu0 %v387
        %604 = vmatprep.subr.mxu0 0.0
        %605 = vmatpush1.msra.mxu0 %v392
        %606 = vmatprep.subr.mxu0 0.0
        %607 = vmatpush1.msra.mxu0 %v397
        %608 = vmatprep.subr.mxu0 0.0
        %609 = vmatpush1.msra.mxu0 %v402
        %610 = vmatprep.subr.mxu0 0.0
        %611 = vmatpush1.msra.mxu0 %v407
        %612 = vmatprep.subr.mxu0 0.0
        %613 = vmatpush1.msra.mxu0 0.0
        %614 = vmatprep.subr.mxu0 0.0
        %615 = vmatpush1.msra.mxu0 0.0
        %616 = vmatprep.subr.mxu0 0.0
        %617 = vmatpush1.msra.mxu0 0.0
        %618 = vmatprep.subr.mxu0 0.0
        %619 = vmatpush1.msra.mxu0 0.0
        %620 = vmatprep.subr.mxu0 0.0
        %621 = vmatpush1.msra.mxu0 0.0
        %622 = vmatprep.subr.mxu0 0.0
        %623 = vmatpush1.msra.mxu0 0.0
        %624 = vmatprep.subr.mxu0 0.0
        %625 = vmatpush1.msra.mxu0 0.0
        %626 = vmatprep.subr.mxu0 0.0
        %627 = vmatpush1.msra.mxu0 0.0
        %628 = vmatprep.subr.mxu0 0.0
        %629 = vmatpush1.msra.mxu0 0.0
        %630 = vmatprep.subr.mxu0 0.0
        %631 = vmatpush1.msra.mxu0 0.0
        %632 = vmatprep.subr.mxu0 0.0
        %633 = vmatpush1.msra.mxu0 0.0
        %634 = vmatprep.subr.mxu0 0.0
        %635 = vmatpush1.msra.mxu0 0.0
        %636 = vmatprep.subr.mxu0 0.0
        %637 = vmatpush1.msra.mxu0 0.0
        %638 = vmatprep.subr.mxu0 0.0
        %639 = vmatpush1.msra.mxu0 0.0
        %640 = vmatprep.subr.mxu0 0.0
        %641 = vmatpush1.msra.mxu0 0.0
        %642 = vmatprep.subr.mxu0 0.0
        %643 = vmatpush1.msra.mxu0 0.0
        %644 = vmatprep.subr.mxu0 0.0
        %645 = vmatpush1.msra.mxu0 0.0
        %646 = vmatprep.subr.mxu0 0.0
        %647 = vmatpush1.msra.mxu0 0.0
        %648 = vmatprep.subr.mxu0 0.0
        %649 = vmatpush1.msra.mxu0 0.0
        %650 = vmatprep.subr.mxu0 0.0
        %651 = vmatpush1.msra.mxu0 0.0
        %652 = vmatprep.subr.mxu0 0.0
        %653 = vmatpush1.msra.mxu0 0.0
        %654 = vmatprep.subr.mxu0 0.0
        %655 = vmatpush1.msra.mxu0 0.0
        %656 = vmatprep.subr.mxu0 0.0
        %657 = vmatpush1.msra.mxu0 0.0
        %658 = vmatprep.subr.mxu0 0.0
        %659 = vmatpush1.msra.mxu0 0.0
        %660 = vmatprep.mubr.f32.mxu0 0.0
        %661 = vmatmul.mubr.f32.gmra.mrb[0].mxu0 %v437
        %v662 = vpop.f32.mrb[0].mxu0
        %v663 = vadd.f32 %v429, %v662
        %v664 = vpop.f32.mrb[0].mxu0
        %665 = vmatprep.mubr.f32.mxu0 0.0
        %666 = vmatmul.mubr.f32.gmra.mrb[0].mxu0 %v440
        %v667 = vpop.f32.mrb[0].mxu0
        %v668 = vadd.f32 %v429, %v667
        %v669 = vpop.f32.mrb[0].mxu0
        %670 = vdwg.mxu0
        %v671 = vmax.f32 %v509, 0.0
        %v672 = vmax.f32 %v511, 0.0
        %v673 = vmax.f32 %v586, 0.0
        %v674 = vmax.f32 %v588, 0.0
        %v675 = vmax.f32 %v663, 0.0
        %v676 = vmax.f32 %v515, 0.0
        %v677 = vmax.f32 %v517, 0.0
        %v678 = vmax.f32 %v592, 0.0
        %v679 = vmax.f32 %v594, 0.0
        %v680 = vmax.f32 %v668, 0.0
        %v681 = vld [vmem:[#allocation7] sm:$0xff]
        %v682 = vld [vmem:[#allocation7 + $0x8] sm:$0xff]
        %v683 = vld [vmem:[#allocation7 + $0x10] sm:$0xff]
        %v684 = vld [vmem:[#allocation7 + $0x18] sm:$0xff]
        %v685 = vld [vmem:[#allocation7 + $0x20] sm:$0xff]
        %v686 = vld [vmem:[#allocation7 + $0x28] sm:$0xff]
        %v687 = vld [vmem:[#allocation7 + $0x30] sm:$0xff]
        %v688 = vld [vmem:[#allocation7 + $0x38] sm:$0xff]
        %v689 = vld [vmem:[#allocation7 + $0x40] sm:$0xff]
        %v690 = vld [vmem:[#allocation7 + $0x48] sm:$0xff]
        %v691 = vld [vmem:[#allocation7 + $0x50] sm:$0xff]
        %v692 = vld [vmem:[#allocation7 + $0x58] sm:$0xff]
        %v693 = vld [vmem:[#allocation7 + $0x60] sm:$0xff]
        %v694 = vld [vmem:[#allocation7 + $0x68] sm:$0xff]
        %v695 = vld [vmem:[#allocation7 + $0x70] sm:$0xff]
        %v696 = vld [vmem:[#allocation7 + $0x78] sm:$0xff]
        %v697 = vld [vmem:[#allocation7 + $0x80] sm:$0xff]
        %v698 = vld [vmem:[#allocation7 + $0x88] sm:$0xff]
        %v699 = vld [vmem:[#allocation7 + $0x90] sm:$0xff]
        %v700 = vld [vmem:[#allocation7 + $0x98] sm:$0xff]
        %v701 = vld [vmem:[#allocation7 + $0xa0] sm:$0xff]
        %v702 = vld [vmem:[#allocation7 + $0xa8] sm:$0xff]
        %v703 = vld [vmem:[#allocation7 + $0xb0] sm:$0xff]
        %v704 = vld [vmem:[#allocation7 + $0xb8] sm:$0xff]
        %v705 = vld [vmem:[#allocation7 + $0xc0] sm:$0xff]
        %v706 = vld [vmem:[#allocation7 + $0xc8] sm:$0xff]
        %v707 = vld [vmem:[#allocation7 + $0xd0] sm:$0xff]
        %v708 = vld [vmem:[#allocation7 + $0xd8] sm:$0xff]
        %v709 = vld [vmem:[#allocation7 + $0xe0] sm:$0xff]
        %v710 = vld [vmem:[#allocation7 + $0xe8] sm:$0xff]
        %v711 = vld [vmem:[#allocation7 + $0xf0] sm:$0xff]
        %v712 = vld [vmem:[#allocation7 + $0xf8] sm:$0xff]
        %v713 = vld [vmem:[#allocation7 + $0x100] sm:$0xff]
        %v714 = vld [vmem:[#allocation7 + $0x108] sm:$0xff]
        %v715 = vld [vmem:[#allocation7 + $0x110] sm:$0xff]
        %v716 = vld [vmem:[#allocation7 + $0x118] sm:$0xff]
        %v717 = vld [vmem:[#allocation7 + $0x120] sm:$0xff]
        %v718 = vld [vmem:[#allocation7 + $0x128] sm:$0xff]
        %v719 = vld [vmem:[#allocation7 + $0x130] sm:$0xff]
        %v720 = vld [vmem:[#allocation7 + $0x138] sm:$0xff]
        %v721 = vld [vmem:[#allocation7 + $0x140] sm:$0xff]
        %v722 = vld [vmem:[#allocation7 + $0x148] sm:$0xff]
        %v723 = vld [vmem:[#allocation7 + $0x150] sm:$0xff]
        %v724 = vld [vmem:[#allocation7 + $0x158] sm:$0xff]
        %v725 = vld [vmem:[#allocation7 + $0x160] sm:$0xff]
        %v726 = vld [vmem:[#allocation7 + $0x168] sm:$0xff]
        %v727 = vld [vmem:[#allocation7 + $0x170] sm:$0xff]
        %v728 = vld [vmem:[#allocation7 + $0x178] sm:$0xff]
        %v729 = vld [vmem:[#allocation7 + $0x180] sm:$0xff]
        %v730 = vld [vmem:[#allocation7 + $0x188] sm:$0xff]
        %v731 = vld [vmem:[#allocation7 + $0x190] sm:$0xff]
        %v732 = vld [vmem:[#allocation7 + $0x198] sm:$0xff]
        %v733 = vld [vmem:[#allocation7 + $0x1a0] sm:$0xff]
        %v734 = vld [vmem:[#allocation7 + $0x1a8] sm:$0xff]
        %v735 = vld [vmem:[#allocation7 + $0x1b0] sm:$0xff]
        %v736 = vld [vmem:[#allocation7 + $0x1b8] sm:$0xff]
        %v737 = vld [vmem:[#allocation7 + $0x1c0] sm:$0xff]
        %v738 = vld [vmem:[#allocation7 + $0x1c8] sm:$0xff]
        %v739 = vld [vmem:[#allocation7 + $0x1d0] sm:$0xff]
        %v740 = vld [vmem:[#allocation7 + $0x1d8] sm:$0xff]
        %v741 = vld [vmem:[#allocation7 + $0x1e0] sm:$0xff]
        %v742 = vld [vmem:[#allocation7 + $0x1e8] sm:$0xff]
        %v743 = vld [vmem:[#allocation7 + $0x1f0] sm:$0xff]
        %v744 = vld [vmem:[#allocation7 + $0x1f8] sm:$0xff]
        %v745 = vld [vmem:[#allocation7 + $0x200] sm:$0xff]
        %v746 = vld [vmem:[#allocation7 + $0x208] sm:$0xff]
        %v747 = vld [vmem:[#allocation7 + $0x210] sm:$0xff]
        %v748 = vld [vmem:[#allocation7 + $0x218] sm:$0xff]
        %v749 = vld [vmem:[#allocation7 + $0x220] sm:$0xff]
        %v750 = vld [vmem:[#allocation7 + $0x228] sm:$0xff]
        %v751 = vld [vmem:[#allocation7 + $0x230] sm:$0xff]
        %v752 = vld [vmem:[#allocation7 + $0x238] sm:$0xff]
        %v753 = vld [vmem:[#allocation7 + $0x240] sm:$0xff]
        %v754 = vld [vmem:[#allocation7 + $0x248] sm:$0xff]
        %v755 = vld [vmem:[#allocation7 + $0x250] sm:$0xff]
        %v756 = vld [vmem:[#allocation7 + $0x258] sm:$0xff]
        %v757 = vld [vmem:[#allocation7 + $0x260] sm:$0xff]
        %v758 = vld [vmem:[#allocation7 + $0x268] sm:$0xff]
        %v759 = vld [vmem:[#allocation7 + $0x270] sm:$0xff]
        %v760 = vld [vmem:[#allocation7 + $0x278] sm:$0xff]
        %v761 = vld [vmem:[#allocation7 + $0x280] sm:$0xff]
        %v762 = vld [vmem:[#allocation7 + $0x288] sm:$0xff]
        %v763 = vld [vmem:[#allocation7 + $0x290] sm:$0xff]
        %v764 = vld [vmem:[#allocation7 + $0x298] sm:$0xff]
        %v765 = vld [vmem:[#allocation7 + $0x2a0] sm:$0xff]
        %v766 = vld [vmem:[#allocation7 + $0x2a8] sm:$0xff]
        %v767 = vld [vmem:[#allocation7 + $0x2b0] sm:$0xff]
        %v768 = vld [vmem:[#allocation7 + $0x2b8] sm:$0xff]
        %v769 = vld [vmem:[#allocation7 + $0x2c0] sm:$0xff]
        %v770 = vld [vmem:[#allocation7 + $0x2c8] sm:$0xff]
        %v771 = vld [vmem:[#allocation7 + $0x2d0] sm:$0xff]
        %v772 = vld [vmem:[#allocation7 + $0x2d8] sm:$0xff]
        %v773 = vld [vmem:[#allocation7 + $0x2e0] sm:$0xff]
        %v774 = vld [vmem:[#allocation7 + $0x2e8] sm:$0xff]
        %v775 = vld [vmem:[#allocation7 + $0x2f0] sm:$0xff]
        %v776 = vld [vmem:[#allocation7 + $0x2f8] sm:$0xff]
        %v777 = vld [vmem:[#allocation7 + $0x300] sm:$0xff]
        %v778 = vld [vmem:[#allocation7 + $0x308] sm:$0xff]
        %v779 = vld [vmem:[#allocation7 + $0x310] sm:$0xff]
        %v780 = vld [vmem:[#allocation7 + $0x318] sm:$0xff]
        %v781 = vld [vmem:[#allocation7 + $0x320] sm:$0xff]
        %v782 = vld [vmem:[#allocation7 + $0x328] sm:$0xff]
        %v783 = vld [vmem:[#allocation7 + $0x330] sm:$0xff]
        %v784 = vld [vmem:[#allocation7 + $0x338] sm:$0xff]
        %v785 = vld [vmem:[#allocation7 + $0x340] sm:$0xff]
        %v786 = vld [vmem:[#allocation7 + $0x348] sm:$0xff]
        %v787 = vld [vmem:[#allocation7 + $0x350] sm:$0xff]
        %v788 = vld [vmem:[#allocation7 + $0x358] sm:$0xff]
        %v789 = vld [vmem:[#allocation7 + $0x360] sm:$0xff]
        %v790 = vld [vmem:[#allocation7 + $0x368] sm:$0xff]
        %v791 = vld [vmem:[#allocation7 + $0x370] sm:$0xff]
        %v792 = vld [vmem:[#allocation7 + $0x378] sm:$0xff]
        %v793 = vld [vmem:[#allocation7 + $0x380] sm:$0xff]
        %v794 = vld [vmem:[#allocation7 + $0x388] sm:$0xff]
        %v795 = vld [vmem:[#allocation7 + $0x390] sm:$0xff]
        %v796 = vld [vmem:[#allocation7 + $0x398] sm:$0xff]
        %v797 = vld [vmem:[#allocation7 + $0x3a0] sm:$0xff]
        %v798 = vld [vmem:[#allocation7 + $0x3a8] sm:$0xff]
        %v799 = vld [vmem:[#allocation7 + $0x3b0] sm:$0xff]
        %v800 = vld [vmem:[#allocation7 + $0x3b8] sm:$0xff]
        %v801 = vld [vmem:[#allocation7 + $0x3c0] sm:$0xff]
        %v802 = vld [vmem:[#allocation7 + $0x3c8] sm:$0xff]
        %v803 = vld [vmem:[#allocation7 + $0x3d0] sm:$0xff]
        %v804 = vld [vmem:[#allocation7 + $0x3d8] sm:$0xff]
        %v805 = vld [vmem:[#allocation7 + $0x3e0] sm:$0xff]
        %v806 = vld [vmem:[#allocation7 + $0x3e8] sm:$0xff]
        %v807 = vld [vmem:[#allocation7 + $0x3f0] sm:$0xff]
        %v808 = vld [vmem:[#allocation7 + $0x3f8] sm:$0xff]
        %v809 = vld [vmem:[#allocation7 + $0x400] sm:$0xff]
        %v810 = vld [vmem:[#allocation7 + $0x408] sm:$0xff]
        %v811 = vld [vmem:[#allocation7 + $0x410] sm:$0xff]
        %v812 = vld [vmem:[#allocation7 + $0x418] sm:$0xff]
        %v813 = vld [vmem:[#allocation7 + $0x420] sm:$0xff]
        %v814 = vld [vmem:[#allocation7 + $0x428] sm:$0xff]
        %v815 = vld [vmem:[#allocation7 + $0x430] sm:$0xff]
        %v816 = vld [vmem:[#allocation7 + $0x438] sm:$0xff]
        %v817 = vld [vmem:[#allocation7 + $0x440] sm:$0xff]
        %v818 = vld [vmem:[#allocation7 + $0x448] sm:$0xff]
        %v819 = vld [vmem:[#allocation7 + $0x450] sm:$0xff]
        %v820 = vld [vmem:[#allocation7 + $0x458] sm:$0xff]
        %v821 = vld [vmem:[#allocation7 + $0x460] sm:$0xff]
        %v822 = vld [vmem:[#allocation7 + $0x468] sm:$0xff]
        %v823 = vld [vmem:[#allocation7 + $0x470] sm:$0xff]
        %v824 = vld [vmem:[#allocation7 + $0x478] sm:$0xff]
        %v825 = vld [vmem:[#allocation7 + $0x480] sm:$0xff]
        %v826 = vld [vmem:[#allocation7 + $0x488] sm:$0xff]
        %v827 = vld [vmem:[#allocation7 + $0x490] sm:$0xff]
        %v828 = vld [vmem:[#allocation7 + $0x498] sm:$0xff]
        %v829 = vld [vmem:[#allocation7 + $0x4a0] sm:$0xff]
        %v830 = vld [vmem:[#allocation7 + $0x4a8] sm:$0xff]
        %v831 = vld [vmem:[#allocation7 + $0x4b0] sm:$0xff]
        %v832 = vld [vmem:[#allocation7 + $0x4b8] sm:$0xff]
        %v833 = vld [vmem:[#allocation7 + $0x4c0] sm:$0xff]
        %v834 = vld [vmem:[#allocation7 + $0x4c8] sm:$0xff]
        %v835 = vld [vmem:[#allocation7 + $0x4d0] sm:$0xff]
        %v836 = vld [vmem:[#allocation7 + $0x4d8] sm:$0xff]
        %v837 = vld [vmem:[#allocation7 + $0x4e0] sm:$0xff]
        %v838 = vld [vmem:[#allocation7 + $0x4e8] sm:$0xff]
        %v839 = vld [vmem:[#allocation7 + $0x4f0] sm:$0xff]
        %v840 = vld [vmem:[#allocation7 + $0x4f8] sm:$0xff]
        %v841 = vld [vmem:[#allocation7 + $0x500] sm:$0xff]
        %v842 = vld [vmem:[#allocation7 + $0x508] sm:$0xff]
        %v843 = vld [vmem:[#allocation7 + $0x510] sm:$0xff]
        %v844 = vld [vmem:[#allocation7 + $0x518] sm:$0xff]
        %v845 = vld [vmem:[#allocation7 + $0x520] sm:$0xff]
        %v846 = vld [vmem:[#allocation7 + $0x528] sm:$0xff]
        %v847 = vld [vmem:[#allocation7 + $0x530] sm:$0xff]
        %v848 = vld [vmem:[#allocation7 + $0x538] sm:$0xff]
        %v849 = vld [vmem:[#allocation7 + $0x540] sm:$0xff]
        %v850 = vld [vmem:[#allocation7 + $0x548] sm:$0xff]
        %v851 = vld [vmem:[#allocation7 + $0x550] sm:$0xff]
        %v852 = vld [vmem:[#allocation7 + $0x558] sm:$0xff]
        %v853 = vld [vmem:[#allocation7 + $0x560] sm:$0xff]
        %v854 = vld [vmem:[#allocation7 + $0x568] sm:$0xff]
        %v855 = vld [vmem:[#allocation7 + $0x570] sm:$0xff]
        %v856 = vld [vmem:[#allocation7 + $0x578] sm:$0xff]
        %v857 = vld [vmem:[#allocation7 + $0x580] sm:$0xff]
        %v858 = vld [vmem:[#allocation7 + $0x588] sm:$0xff]
        %v859 = vld [vmem:[#allocation7 + $0x590] sm:$0xff]
        %v860 = vld [vmem:[#allocation7 + $0x598] sm:$0xff]
        %v861 = vld [vmem:[#allocation7 + $0x5a0] sm:$0xff]
        %v862 = vld [vmem:[#allocation7 + $0x5a8] sm:$0xff]
        %v863 = vld [vmem:[#allocation7 + $0x5b0] sm:$0xff]
        %v864 = vld [vmem:[#allocation7 + $0x5b8] sm:$0xff]
        %v865 = vld [vmem:[#allocation7 + $0x5c0] sm:$0xff]
        %v866 = vld [vmem:[#allocation7 + $0x5c8] sm:$0xff]
        %v867 = vld [vmem:[#allocation7 + $0x5d0] sm:$0xff]
        %v868 = vld [vmem:[#allocation7 + $0x5d8] sm:$0xff]
        %v869 = vld [vmem:[#allocation7 + $0x5e0] sm:$0xff]
        %v870 = vld [vmem:[#allocation7 + $0x5e8] sm:$0xff]
        %v871 = vld [vmem:[#allocation7 + $0x5f0] sm:$0xff]
        %v872 = vld [vmem:[#allocation7 + $0x5f8] sm:$0xff]
        %v873 = vld [vmem:[#allocation7 + $0x600] sm:$0xff]
        %v874 = vld [vmem:[#allocation7 + $0x608] sm:$0xff]
        %v875 = vld [vmem:[#allocation7 + $0x610] sm:$0xff]
        %v876 = vld [vmem:[#allocation7 + $0x618] sm:$0xff]
        %v877 = vld [vmem:[#allocation7 + $0x620] sm:$0xff]
        %v878 = vld [vmem:[#allocation7 + $0x628] sm:$0xff]
        %v879 = vld [vmem:[#allocation7 + $0x630] sm:$0xff]
        %v880 = vld [vmem:[#allocation7 + $0x638] sm:$0xff]
        %v881 = vld [vmem:[#allocation7 + $0x640] sm:$0xff]
        %v882 = vld [vmem:[#allocation7 + $0x648] sm:$0xff]
        %v883 = vld [vmem:[#allocation7 + $0x650] sm:$0xff]
        %v884 = vld [vmem:[#allocation7 + $0x658] sm:$0xff]
        %v885 = vld [vmem:[#allocation7 + $0x660] sm:$0xff]
        %v886 = vld [vmem:[#allocation7 + $0x668] sm:$0xff]
        %v887 = vld [vmem:[#allocation7 + $0x670] sm:$0xff]
        %v888 = vld [vmem:[#allocation7 + $0x678] sm:$0xff]
        %v889 = vld [vmem:[#allocation7 + $0x680] sm:$0xff]
        %v890 = vld [vmem:[#allocation7 + $0x688] sm:$0xff]
        %v891 = vld [vmem:[#allocation7 + $0x690] sm:$0xff]
        %v892 = vld [vmem:[#allocation7 + $0x698] sm:$0xff]
        %v893 = vld [vmem:[#allocation7 + $0x6a0] sm:$0xff]
        %v894 = vld [vmem:[#allocation7 + $0x6a8] sm:$0xff]
        %v895 = vld [vmem:[#allocation7 + $0x6b0] sm:$0xff]
        %v896 = vld [vmem:[#allocation7 + $0x6b8] sm:$0xff]
        %v897 = vld [vmem:[#allocation7 + $0x6c0] sm:$0xff]
        %v898 = vld [vmem:[#allocation7 + $0x6c8] sm:$0xff]
        %v899 = vld [vmem:[#allocation7 + $0x6d0] sm:$0xff]
        %v900 = vld [vmem:[#allocation7 + $0x6d8] sm:$0xff]
        %v901 = vld [vmem:[#allocation7 + $0x6e0] sm:$0xff]
        %v902 = vld [vmem:[#allocation7 + $0x6e8] sm:$0xff]
        %v903 = vld [vmem:[#allocation7 + $0x6f0] sm:$0xff]
        %v904 = vld [vmem:[#allocation7 + $0x6f8] sm:$0xff]
        %v905 = vld [vmem:[#allocation7 + $0x700] sm:$0xff]
        %v906 = vld [vmem:[#allocation7 + $0x708] sm:$0xff]
        %v907 = vld [vmem:[#allocation7 + $0x710] sm:$0xff]
        %v908 = vld [vmem:[#allocation7 + $0x718] sm:$0xff]
        %v909 = vld [vmem:[#allocation7 + $0x720] sm:$0xff]
        %v910 = vld [vmem:[#allocation7 + $0x728] sm:$0xff]
        %v911 = vld [vmem:[#allocation7 + $0x730] sm:$0xff]
        %v912 = vld [vmem:[#allocation7 + $0x738] sm:$0xff]
        %v913 = vld [vmem:[#allocation7 + $0x740] sm:$0xff]
        %v914 = vld [vmem:[#allocation7 + $0x748] sm:$0xff]
        %v915 = vld [vmem:[#allocation7 + $0x750] sm:$0xff]
        %v916 = vld [vmem:[#allocation7 + $0x758] sm:$0xff]
        %v917 = vld [vmem:[#allocation7 + $0x760] sm:$0xff]
        %v918 = vld [vmem:[#allocation7 + $0x768] sm:$0xff]
        %v919 = vld [vmem:[#allocation7 + $0x770] sm:$0xff]
        %v920 = vld [vmem:[#allocation7 + $0x778] sm:$0xff]
        %v921 = vld [vmem:[#allocation7 + $0x780] sm:$0xff]
        %v922 = vld [vmem:[#allocation7 + $0x788] sm:$0xff]
        %v923 = vld [vmem:[#allocation7 + $0x790] sm:$0xff]
        %v924 = vld [vmem:[#allocation7 + $0x798] sm:$0xff]
        %v925 = vld [vmem:[#allocation7 + $0x7a0] sm:$0xff]
        %v926 = vld [vmem:[#allocation7 + $0x7a8] sm:$0xff]
        %v927 = vld [vmem:[#allocation7 + $0x7b0] sm:$0xff]
        %v928 = vld [vmem:[#allocation7 + $0x7b8] sm:$0xff]
        %v929 = vld [vmem:[#allocation7 + $0x7c0] sm:$0xff]
        %v930 = vld [vmem:[#allocation7 + $0x7c8] sm:$0xff]
        %v931 = vld [vmem:[#allocation7 + $0x7d0] sm:$0xff]
        %v932 = vld [vmem:[#allocation7 + $0x7d8] sm:$0xff]
        %v933 = vld [vmem:[#allocation7 + $0x7e0] sm:$0xff]
        %v934 = vld [vmem:[#allocation7 + $0x7e8] sm:$0xff]
        %v935 = vld [vmem:[#allocation7 + $0x7f0] sm:$0xff]
        %v936 = vld [vmem:[#allocation7 + $0x7f8] sm:$0xff]
        %v937 = vld [vmem:[#allocation7 + $0x800] sm:$0xff]
        %v938 = vld [vmem:[#allocation7 + $0x808] sm:$0xff]
        %v939 = vld [vmem:[#allocation7 + $0x810] sm:$0xff]
        %v940 = vld [vmem:[#allocation7 + $0x818] sm:$0xff]
        %v941 = vld [vmem:[#allocation7 + $0x820] sm:$0xff]
        %v942 = vld [vmem:[#allocation7 + $0x828] sm:$0xff]
        %v943 = vld [vmem:[#allocation7 + $0x830] sm:$0xff]
        %v944 = vld [vmem:[#allocation7 + $0x838] sm:$0xff]
        %v945 = vld [vmem:[#allocation7 + $0x840] sm:$0xff]
        %v946 = vld [vmem:[#allocation7 + $0x848] sm:$0xff]
        %v947 = vld [vmem:[#allocation7 + $0x850] sm:$0xff]
        %v948 = vld [vmem:[#allocation7 + $0x858] sm:$0xff]
        %v949 = vld [vmem:[#allocation7 + $0x860] sm:$0xff]
        %v950 = vld [vmem:[#allocation7 + $0x868] sm:$0xff]
        %v951 = vld [vmem:[#allocation7 + $0x870] sm:$0xff]
        %v952 = vld [vmem:[#allocation7 + $0x878] sm:$0xff]
        %v953 = vld [vmem:[#allocation7 + $0x880] sm:$0xff]
        %v954 = vld [vmem:[#allocation7 + $0x888] sm:$0xff]
        %v955 = vld [vmem:[#allocation7 + $0x890] sm:$0xff]
        %v956 = vld [vmem:[#allocation7 + $0x898] sm:$0xff]
        %v957 = vld [vmem:[#allocation7 + $0x8a0] sm:$0xff]
        %v958 = vld [vmem:[#allocation7 + $0x8a8] sm:$0xff]
        %v959 = vld [vmem:[#allocation7 + $0x8b0] sm:$0xff]
        %v960 = vld [vmem:[#allocation7 + $0x8b8] sm:$0xff]
        %v961 = vld [vmem:[#allocation7 + $0x8c0] sm:$0xff]
        %v962 = vld [vmem:[#allocation7 + $0x8c8] sm:$0xff]
        %v963 = vld [vmem:[#allocation7 + $0x8d0] sm:$0xff]
        %v964 = vld [vmem:[#allocation7 + $0x8d8] sm:$0xff]
        %v965 = vld [vmem:[#allocation7 + $0x8e0] sm:$0xff]
        %v966 = vld [vmem:[#allocation7 + $0x8e8] sm:$0xff]
        %v967 = vld [vmem:[#allocation7 + $0x8f0] sm:$0xff]
        %v968 = vld [vmem:[#allocation7 + $0x8f8] sm:$0xff]
        %v969 = vld [vmem:[#allocation7 + $0x900] sm:$0xff]
        %v970 = vld [vmem:[#allocation7 + $0x908] sm:$0xff]
        %v971 = vld [vmem:[#allocation7 + $0x910] sm:$0xff]
        %v972 = vld [vmem:[#allocation7 + $0x918] sm:$0xff]
        %v973 = vld [vmem:[#allocation7 + $0x920] sm:$0xff]
        %v974 = vld [vmem:[#allocation7 + $0x928] sm:$0xff]
        %v975 = vld [vmem:[#allocation7 + $0x930] sm:$0xff]
        %v976 = vld [vmem:[#allocation7 + $0x938] sm:$0xff]
        %v977 = vld [vmem:[#allocation7 + $0x940] sm:$0xff]
        %v978 = vld [vmem:[#allocation7 + $0x948] sm:$0xff]
        %v979 = vld [vmem:[#allocation7 + $0x950] sm:$0xff]
        %v980 = vld [vmem:[#allocation7 + $0x958] sm:$0xff]
        %v981 = vld [vmem:[#allocation7 + $0x960] sm:$0xff]
        %v982 = vld [vmem:[#allocation7 + $0x968] sm:$0xff]
        %v983 = vld [vmem:[#allocation7 + $0x970] sm:$0xff]
        %v984 = vld [vmem:[#allocation7 + $0x978] sm:$0xff]
        %v985 = vld [vmem:[#allocation7 + $0x980] sm:$0xff]
        %v986 = vld [vmem:[#allocation7 + $0x988] sm:$0xff]
        %v987 = vld [vmem:[#allocation7 + $0x990] sm:$0xff]
        %v988 = vld [vmem:[#allocation7 + $0x998] sm:$0xff]
        %v989 = vld [vmem:[#allocation7 + $0x9a0] sm:$0xff]
        %v990 = vld [vmem:[#allocation7 + $0x9a8] sm:$0xff]
        %v991 = vld [vmem:[#allocation7 + $0x9b0] sm:$0xff]
        %v992 = vld [vmem:[#allocation7 + $0x9b8] sm:$0xff]
        %v993 = vld [vmem:[#allocation7 + $0x9c0] sm:$0xff]
        %v994 = vld [vmem:[#allocation7 + $0x9c8] sm:$0xff]
        %v995 = vld [vmem:[#allocation7 + $0x9d0] sm:$0xff]
        %v996 = vld [vmem:[#allocation7 + $0x9d8] sm:$0xff]
        %v997 = vld [vmem:[#allocation7 + $0x9e0] sm:$0xff]
        %v998 = vld [vmem:[#allocation7 + $0x9e8] sm:$0xff]
        %v999 = vld [vmem:[#allocation7 + $0x9f0] sm:$0xff]
        %v1000 = vld [vmem:[#allocation7 + $0x9f8] sm:$0xff]
        %v1001 = vld [vmem:[#allocation7 + $0xa00] sm:$0xff]
        %v1002 = vld [vmem:[#allocation7 + $0xa08] sm:$0xff]
        %v1003 = vld [vmem:[#allocation7 + $0xa10] sm:$0xff]
        %v1004 = vld [vmem:[#allocation7 + $0xa18] sm:$0xff]
        %v1005 = vld [vmem:[#allocation7 + $0xa20] sm:$0xff]
        %v1006 = vld [vmem:[#allocation7 + $0xa28] sm:$0xff]
        %v1007 = vld [vmem:[#allocation7 + $0xa30] sm:$0xff]
        %v1008 = vld [vmem:[#allocation7 + $0xa38] sm:$0xff]
        %v1009 = vld [vmem:[#allocation7 + $0xa40] sm:$0xff]
        %v1010 = vld [vmem:[#allocation7 + $0xa48] sm:$0xff]
        %v1011 = vld [vmem:[#allocation7 + $0xa50] sm:$0xff]
        %v1012 = vld [vmem:[#allocation7 + $0xa58] sm:$0xff]
        %v1013 = vld [vmem:[#allocation7 + $0xa60] sm:$0xff]
        %v1014 = vld [vmem:[#allocation7 + $0xa68] sm:$0xff]
        %v1015 = vld [vmem:[#allocation7 + $0xa70] sm:$0xff]
        %v1016 = vld [vmem:[#allocation7 + $0xa78] sm:$0xff]
        %v1017 = vld [vmem:[#allocation7 + $0xa80] sm:$0xff]
        %v1018 = vld [vmem:[#allocation7 + $0xa88] sm:$0xff]
        %v1019 = vld [vmem:[#allocation7 + $0xa90] sm:$0xff]
        %v1020 = vld [vmem:[#allocation7 + $0xa98] sm:$0xff]
        %v1021 = vld [vmem:[#allocation7 + $0xaa0] sm:$0xff]
        %v1022 = vld [vmem:[#allocation7 + $0xaa8] sm:$0xff]
        %v1023 = vld [vmem:[#allocation7 + $0xab0] sm:$0xff]
        %v1024 = vld [vmem:[#allocation7 + $0xab8] sm:$0xff]
        %v1025 = vld [vmem:[#allocation7 + $0xac0] sm:$0xff]
        %v1026 = vld [vmem:[#allocation7 + $0xac8] sm:$0xff]
        %v1027 = vld [vmem:[#allocation7 + $0xad0] sm:$0xff]
        %v1028 = vld [vmem:[#allocation7 + $0xad8] sm:$0xff]
        %v1029 = vld [vmem:[#allocation7 + $0xae0] sm:$0xff]
        %v1030 = vld [vmem:[#allocation7 + $0xae8] sm:$0xff]
        %v1031 = vld [vmem:[#allocation7 + $0xaf0] sm:$0xff]
        %v1032 = vld [vmem:[#allocation7 + $0xaf8] sm:$0xff]
        %v1033 = vld [vmem:[#allocation7 + $0xb00] sm:$0xff]
        %v1034 = vld [vmem:[#allocation7 + $0xb08] sm:$0xff]
        %v1035 = vld [vmem:[#allocation7 + $0xb10] sm:$0xff]
        %v1036 = vld [vmem:[#allocation7 + $0xb18] sm:$0xff]
        %v1037 = vld [vmem:[#allocation7 + $0xb20] sm:$0xff]
        %v1038 = vld [vmem:[#allocation7 + $0xb28] sm:$0xff]
        %v1039 = vld [vmem:[#allocation7 + $0xb30] sm:$0xff]
        %v1040 = vld [vmem:[#allocation7 + $0xb38] sm:$0xff]
        %v1041 = vld [vmem:[#allocation7 + $0xb40] sm:$0xff]
        %v1042 = vld [vmem:[#allocation7 + $0xb48] sm:$0xff]
        %v1043 = vld [vmem:[#allocation7 + $0xb50] sm:$0xff]
        %v1044 = vld [vmem:[#allocation7 + $0xb58] sm:$0xff]
        %v1045 = vld [vmem:[#allocation7 + $0xb60] sm:$0xff]
        %v1046 = vld [vmem:[#allocation7 + $0xb68] sm:$0xff]
        %v1047 = vld [vmem:[#allocation7 + $0xb70] sm:$0xff]
        %v1048 = vld [vmem:[#allocation7 + $0xb78] sm:$0xff]
        %v1049 = vld [vmem:[#allocation7 + $0xb80] sm:$0xff]
        %v1050 = vld [vmem:[#allocation7 + $0xb88] sm:$0xff]
        %v1051 = vld [vmem:[#allocation7 + $0xb90] sm:$0xff]
        %v1052 = vld [vmem:[#allocation7 + $0xb98] sm:$0xff]
        %v1053 = vld [vmem:[#allocation7 + $0xba0] sm:$0xff]
        %v1054 = vld [vmem:[#allocation7 + $0xba8] sm:$0xff]
        %v1055 = vld [vmem:[#allocation7 + $0xbb0] sm:$0xff]
        %v1056 = vld [vmem:[#allocation7 + $0xbb8] sm:$0xff]
        %v1057 = vld [vmem:[#allocation7 + $0xbc0] sm:$0xff]
        %v1058 = vld [vmem:[#allocation7 + $0xbc8] sm:$0xff]
        %v1059 = vld [vmem:[#allocation7 + $0xbd0] sm:$0xff]
        %v1060 = vld [vmem:[#allocation7 + $0xbd8] sm:$0xff]
        %v1061 = vld [vmem:[#allocation7 + $0xbe0] sm:$0xff]
        %v1062 = vld [vmem:[#allocation7 + $0xbe8] sm:$0xff]
        %v1063 = vld [vmem:[#allocation7 + $0xbf0] sm:$0xff]
        %v1064 = vld [vmem:[#allocation7 + $0xbf8] sm:$0xff]
        %v1065 = vld [vmem:[#allocation7 + $0xc00] sm:$0xff]
        %v1066 = vld [vmem:[#allocation7 + $0xc08] sm:$0xff]
        %v1067 = vld [vmem:[#allocation7 + $0xc10] sm:$0xff]
        %v1068 = vld [vmem:[#allocation7 + $0xc18] sm:$0xff]
        %v1069 = vld [vmem:[#allocation7 + $0xc20] sm:$0xff]
        %v1070 = vld [vmem:[#allocation7 + $0xc28] sm:$0xff]
        %v1071 = vld [vmem:[#allocation7 + $0xc30] sm:$0xff]
        %v1072 = vld [vmem:[#allocation7 + $0xc38] sm:$0xff]
        %v1073 = vld [vmem:[#allocation7 + $0xc40] sm:$0xff]
        %v1074 = vld [vmem:[#allocation7 + $0xc48] sm:$0xff]
        %v1075 = vld [vmem:[#allocation7 + $0xc50] sm:$0xff]
        %v1076 = vld [vmem:[#allocation7 + $0xc58] sm:$0xff]
        %v1077 = vld [vmem:[#allocation7 + $0xc60] sm:$0xff]
        %v1078 = vld [vmem:[#allocation7 + $0xc68] sm:$0xff]
        %v1079 = vld [vmem:[#allocation7 + $0xc70] sm:$0xff]
        %v1080 = vld [vmem:[#allocation7 + $0xc78] sm:$0xff]
        %v1081 = vld [vmem:[#allocation7 + $0xc80] sm:$0xff]
        %v1082 = vld [vmem:[#allocation7 + $0xc88] sm:$0xff]
        %v1083 = vld [vmem:[#allocation7 + $0xc90] sm:$0xff]
        %v1084 = vld [vmem:[#allocation7 + $0xc98] sm:$0xff]
        %v1085 = vld [vmem:[#allocation7 + $0xca0] sm:$0xff]
        %v1086 = vld [vmem:[#allocation7 + $0xca8] sm:$0xff]
        %v1087 = vld [vmem:[#allocation7 + $0xcb0] sm:$0xff]
        %v1088 = vld [vmem:[#allocation7 + $0xcb8] sm:$0xff]
        %v1089 = vld [vmem:[#allocation7 + $0xcc0] sm:$0xff]
        %v1090 = vld [vmem:[#allocation7 + $0xcc8] sm:$0xff]
        %v1091 = vld [vmem:[#allocation7 + $0xcd0] sm:$0xff]
        %v1092 = vld [vmem:[#allocation7 + $0xcd8] sm:$0xff]
        %v1093 = vld [vmem:[#allocation7 + $0xce0] sm:$0xff]
        %v1094 = vld [vmem:[#allocation7 + $0xce8] sm:$0xff]
        %v1095 = vld [vmem:[#allocation7 + $0xcf0] sm:$0xff]
        %v1096 = vld [vmem:[#allocation7 + $0xcf8] sm:$0xff]
        %v1097 = vld [vmem:[#allocation7 + $0xd00] sm:$0xff]
        %v1098 = vld [vmem:[#allocation7 + $0xd08] sm:$0xff]
        %v1099 = vld [vmem:[#allocation7 + $0xd10] sm:$0xff]
        %v1100 = vld [vmem:[#allocation7 + $0xd18] sm:$0xff]
        %v1101 = vld [vmem:[#allocation7 + $0xd20] sm:$0xff]
        %v1102 = vld [vmem:[#allocation7 + $0xd28] sm:$0xff]
        %v1103 = vld [vmem:[#allocation7 + $0xd30] sm:$0xff]
        %v1104 = vld [vmem:[#allocation7 + $0xd38] sm:$0xff]
        %v1105 = vld [vmem:[#allocation7 + $0xd40] sm:$0xff]
        %v1106 = vld [vmem:[#allocation7 + $0xd48] sm:$0xff]
        %v1107 = vld [vmem:[#allocation7 + $0xd50] sm:$0xff]
        %v1108 = vld [vmem:[#allocation7 + $0xd58] sm:$0xff]
        %v1109 = vld [vmem:[#allocation7 + $0xd60] sm:$0xff]
        %v1110 = vld [vmem:[#allocation7 + $0xd68] sm:$0xff]
        %v1111 = vld [vmem:[#allocation7 + $0xd70] sm:$0xff]
        %v1112 = vld [vmem:[#allocation7 + $0xd78] sm:$0xff]
        %v1113 = vld [vmem:[#allocation10] sm:$0x3f]
        %v1115 = vlaneseq
        %v1116 = vshrl.u32 %v1115, 7
        %v1117 = vsub.s32 0, %v1116
        %v1118 = vrot.slane %v1113, %v1117
        %v1119 = vlaneseq
        %v1120 = vshrl.u32 %v1119, 7
        %v1121 = vsub.s32 1, %v1120
        %v1122 = vrot.slane %v1113, %v1121
        %v1123 = vlaneseq
        %v1124 = vshrl.u32 %v1123, 7
        %v1125 = vsub.s32 2, %v1124
        %v1126 = vrot.slane %v1113, %v1125
        %v1127 = vlaneseq
        %v1128 = vshrl.u32 %v1127, 7
        %v1129 = vsub.s32 3, %v1128
        %v1130 = vrot.slane %v1113, %v1129
        %v1131 = vlaneseq
        %v1132 = vshrl.u32 %v1131, 7
        %v1133 = vsub.s32 4, %v1132
        %v1134 = vrot.slane %v1113, %v1133
        %v1135 = vlaneseq
        %v1136 = vshrl.u32 %v1135, 7
        %v1137 = vsub.s32 5, %v1136
        %v1138 = vrot.slane %v1113, %v1137
        %v1146 = vsel %vm435, %v675, 0
        %v1149 = vsel %vm435, %v680, 0
        %1151 = vmatprep.subr.mxu0 %v682
        %1152 = vmatpush1.msra.mxu0 %v681
        %1153 = vmatprep.subr.mxu0 %v688
        %1154 = vmatpush1.msra.mxu0 %v687
        %1155 = vmatprep.subr.mxu0 %v694
        %1156 = vmatpush1.msra.mxu0 %v693
        %1157 = vmatprep.subr.mxu0 %v700
        %1158 = vmatpush1.msra.mxu0 %v699
        %1159 = vmatprep.subr.mxu0 %v706
        %1160 = vmatpush1.msra.mxu0 %v705
        %1161 = vmatprep.subr.mxu0 %v712
        %1162 = vmatpush1.msra.mxu0 %v711
        %1163 = vmatprep.subr.mxu0 %v718
        %1164 = vmatpush1.msra.mxu0 %v717
        %1165 = vmatprep.subr.mxu0 %v724
        %1166 = vmatpush1.msra.mxu0 %v723
        %1167 = vmatprep.subr.mxu0 %v730
        %1168 = vmatpush1.msra.mxu0 %v729
        %1169 = vmatprep.subr.mxu0 %v736
        %1170 = vmatpush1.msra.mxu0 %v735
        %1171 = vmatprep.subr.mxu0 %v742
        %1172 = vmatpush1.msra.mxu0 %v741
        %1173 = vmatprep.subr.mxu0 %v748
        %1174 = vmatpush1.msra.mxu0 %v747
        %1175 = vmatprep.subr.mxu0 %v754
        %1176 = vmatpush1.msra.mxu0 %v753
        %1177 = vmatprep.subr.mxu0 %v760
        %1178 = vmatpush1.msra.mxu0 %v759
        %1179 = vmatprep.subr.mxu0 %v766
        %1180 = vmatpush1.msra.mxu0 %v765
        %1181 = vmatprep.subr.mxu0 %v772
        %1182 = vmatpush1.msra.mxu0 %v771
        %1183 = vmatprep.subr.mxu0 %v778
        %1184 = vmatpush1.msra.mxu0 %v777
        %1185 = vmatprep.subr.mxu0 %v784
        %1186 = vmatpush1.msra.mxu0 %v783
        %1187 = vmatprep.subr.mxu0 %v790
        %1188 = vmatpush1.msra.mxu0 %v789
        %1189 = vmatprep.subr.mxu0 %v796
        %1190 = vmatpush1.msra.mxu0 %v795
        %1191 = vmatprep.subr.mxu0 %v802
        %1192 = vmatpush1.msra.mxu0 %v801
        %1193 = vmatprep.subr.mxu0 %v808
        %1194 = vmatpush1.msra.mxu0 %v807
        %1195 = vmatprep.subr.mxu0 %v814
        %1196 = vmatpush1.msra.mxu0 %v813
        %1197 = vmatprep.subr.mxu0 %v820
        %1198 = vmatpush1.msra.mxu0 %v819
        %1199 = vmatprep.subr.mxu0 %v826
        %1200 = vmatpush1.msra.mxu0 %v825
        %1201 = vmatprep.subr.mxu0 %v832
        %1202 = vmatpush1.msra.mxu0 %v831
        %1203 = vmatprep.subr.mxu0 %v838
        %1204 = vmatpush1.msra.mxu0 %v837
        %1205 = vmatprep.subr.mxu0 %v844
        %1206 = vmatpush1.msra.mxu0 %v843
        %1207 = vmatprep.subr.mxu0 %v850
        %1208 = vmatpush1.msra.mxu0 %v849
        %1209 = vmatprep.subr.mxu0 %v856
        %1210 = vmatpush1.msra.mxu0 %v855
        %1211 = vmatprep.subr.mxu0 %v862
        %1212 = vmatpush1.msra.mxu0 %v861
        %1213 = vmatprep.subr.mxu0 %v868
        %1214 = vmatpush1.msra.mxu0 %v867
        %1215 = vmatprep.mubr.f32.mxu0 %v672
        %1216 = vmatmul.mubr.f32.gmra.mrb[0].mxu0 %v671
        %v1217 = vpop.f32.mrb[0].mxu0
        %v1218 = vadd.f32 %v1118, %v1217
        %v1219 = vpop.f32.mrb[0].mxu0
        %v1220 = vadd.f32 %v1122, %v1219
        %1221 = vmatprep.mubr.f32.mxu0 %v677
        %1222 = vmatmul.mubr.f32.gmra.mrb[0].mxu0 %v676
        %v1223 = vpop.f32.mrb[0].mxu0
        %v1224 = vadd.f32 %v1118, %v1223
        %v1225 = vpop.f32.mrb[0].mxu0
        %v1226 = vadd.f32 %v1122, %v1225
        %1227 = vdwg.mxu0
        %1228 = vmatprep.subr.mxu0 %v874
        %1229 = vmatpush1.msra.mxu0 %v873
        %1230 = vmatprep.subr.mxu0 %v880
        %1231 = vmatpush1.msra.mxu0 %v879
        %1232 = vmatprep.subr.mxu0 %v886
        %1233 = vmatpush1.msra.mxu0 %v885
        %1234 = vmatprep.subr.mxu0 %v892
        %1235 = vmatpush1.msra.mxu0 %v891
        %1236 = vmatprep.subr.mxu0 %v898
        %1237 = vmatpush1.msra.mxu0 %v897
        %1238 = vmatprep.subr.mxu0 %v904
        %1239 = vmatpush1.msra.mxu0 %v903
        %1240 = vmatprep.subr.mxu0 %v910
        %1241 = vmatpush1.msra.mxu0 %v909
        %1242 = vmatprep.subr.mxu0 %v916
        %1243 = vmatpush1.msra.mxu0 %v915
        %1244 = vmatprep.subr.mxu0 %v922
        %1245 = vmatpush1.msra.mxu0 %v921
        %1246 = vmatprep.subr.mxu0 %v928
        %1247 = vmatpush1.msra.mxu0 %v927
        %1248 = vmatprep.subr.mxu0 %v934
        %1249 = vmatpush1.msra.mxu0 %v933
        %1250 = vmatprep.subr.mxu0 %v940
        %1251 = vmatpush1.msra.mxu0 %v939
        %1252 = vmatprep.subr.mxu0 %v946
        %1253 = vmatpush1.msra.mxu0 %v945
        %1254 = vmatprep.subr.mxu0 %v952
        %1255 = vmatpush1.msra.mxu0 %v951
        %1256 = vmatprep.subr.mxu0 %v958
        %1257 = vmatpush1.msra.mxu0 %v957
        %1258 = vmatprep.subr.mxu0 %v964
        %1259 = vmatpush1.msra.mxu0 %v963
        %1260 = vmatprep.subr.mxu0 %v970
        %1261 = vmatpush1.msra.mxu0 %v969
        %1262 = vmatprep.subr.mxu0 %v976
        %1263 = vmatpush1.msra.mxu0 %v975
        %1264 = vmatprep.subr.mxu0 %v982
        %1265 = vmatpush1.msra.mxu0 %v981
        %1266 = vmatprep.subr.mxu0 %v988
        %1267 = vmatpush1.msra.mxu0 %v987
        %1268 = vmatprep.subr.mxu0 %v994
        %1269 = vmatpush1.msra.mxu0 %v993
        %1270 = vmatprep.subr.mxu0 %v1000
        %1271 = vmatpush1.msra.mxu0 %v999
        %1272 = vmatprep.subr.mxu0 %v1006
        %1273 = vmatpush1.msra.mxu0 %v1005
        %1274 = vmatprep.subr.mxu0 %v1012
        %1275 = vmatpush1.msra.mxu0 %v1011
        %1276 = vmatprep.subr.mxu0 %v1018
        %1277 = vmatpush1.msra.mxu0 %v1017
        %1278 = vmatprep.subr.mxu0 %v1024
        %1279 = vmatpush1.msra.mxu0 %v1023
        %1280 = vmatprep.subr.mxu0 %v1030
        %1281 = vmatpush1.msra.mxu0 %v1029
        %1282 = vmatprep.subr.mxu0 %v1036
        %1283 = vmatpush1.msra.mxu0 %v1035
        %1284 = vmatprep.subr.mxu0 %v1042
        %1285 = vmatpush1.msra.mxu0 %v1041
        %1286 = vmatprep.subr.mxu0 %v1048
        %1287 = vmatpush1.msra.mxu0 %v1047
        %1288 = vmatprep.subr.mxu0 %v1054
        %1289 = vmatpush1.msra.mxu0 %v1053
        %1290 = vmatprep.subr.mxu0 %v1060
        %1291 = vmatpush1.msra.mxu0 %v1059
        %1292 = vmatprep.mubr.f32.mxu0 %v674
        %1293 = vmatmul.mubr.f32.gmra.mrb[0].mxu0 %v673
        %v1294 = vpop.f32.mrb[0].mxu0
        %v1295 = vadd.f32 %v1218, %v1294
        %v1296 = vpop.f32.mrb[0].mxu0
        %v1297 = vadd.f32 %v1220, %v1296
        %1298 = vmatprep.mubr.f32.mxu0 %v679
        %1299 = vmatmul.mubr.f32.gmra.mrb[0].mxu0 %v678
        %v1300 = vpop.f32.mrb[0].mxu0
        %v1301 = vadd.f32 %v1224, %v1300
        %v1302 = vpop.f32.mrb[0].mxu0
        %v1303 = vadd.f32 %v1226, %v1302
        %1304 = vdwg.mxu0
        %1305 = vmatprep.subr.mxu0 %v1066
        %1306 = vmatpush1.msra.mxu0 %v1065
        %1307 = vmatprep.subr.mxu0 %v1072
        %1308 = vmatpush1.msra.mxu0 %v1071
        %1309 = vmatprep.subr.mxu0 %v1078
        %1310 = vmatpush1.msra.mxu0 %v1077
        %1311 = vmatprep.subr.mxu0 %v1084
        %1312 = vmatpush1.msra.mxu0 %v1083
        %1313 = vmatprep.subr.mxu0 %v1090
        %1314 = vmatpush1.msra.mxu0 %v1089
        %1315 = vmatprep.subr.mxu0 %v1096
        %1316 = vmatpush1.msra.mxu0 %v1095
        %1317 = vmatprep.subr.mxu0 %v1102
        %1318 = vmatpush1.msra.mxu0 %v1101
        %1319 = vmatprep.subr.mxu0 %v1108
        %1320 = vmatpush1.msra.mxu0 %v1107
        %1321 = vmatprep.subr.mxu0 0.0
        %1322 = vmatpush1.msra.mxu0 0.0
        %1323 = vmatprep.subr.mxu0 0.0
        %1324 = vmatpush1.msra.mxu0 0.0
        %1325 = vmatprep.subr.mxu0 0.0
        %1326 = vmatpush1.msra.mxu0 0.0
        %1327 = vmatprep.subr.mxu0 0.0
        %1328 = vmatpush1.msra.mxu0 0.0
        %1329 = vmatprep.subr.mxu0 0.0
        %1330 = vmatpush1.msra.mxu0 0.0
        %1331 = vmatprep.subr.mxu0 0.0
        %1332 = vmatpush1.msra.mxu0 0.0
        %1333 = vmatprep.subr.mxu0 0.0
        %1334 = vmatpush1.msra.mxu0 0.0
        %1335 = vmatprep.subr.mxu0 0.0
        %1336 = vmatpush1.msra.mxu0 0.0
        %1337 = vmatprep.subr.mxu0 0.0
        %1338 = vmatpush1.msra.mxu0 0.0
        %1339 = vmatprep.subr.mxu0 0.0
        %1340 = vmatpush1.msra.mxu0 0.0
        %1341 = vmatprep.subr.mxu0 0.0
        %1342 = vmatpush1.msra.mxu0 0.0
        %1343 = vmatprep.subr.mxu0 0.0
        %1344 = vmatpush1.msra.mxu0 0.0
        %1345 = vmatprep.subr.mxu0 0.0
        %1346 = vmatpush1.msra.mxu0 0.0
        %1347 = vmatprep.subr.mxu0 0.0
        %1348 = vmatpush1.msra.mxu0 0.0
        %1349 = vmatprep.subr.mxu0 0.0
        %1350 = vmatpush1.msra.mxu0 0.0
        %1351 = vmatprep.subr.mxu0 0.0
        %1352 = vmatpush1.msra.mxu0 0.0
        %1353 = vmatprep.subr.mxu0 0.0
        %1354 = vmatpush1.msra.mxu0 0.0
        %1355 = vmatprep.subr.mxu0 0.0
        %1356 = vmatpush1.msra.mxu0 0.0
        %1357 = vmatprep.subr.mxu0 0.0
        %1358 = vmatpush1.msra.mxu0 0.0
        %1359 = vmatprep.subr.mxu0 0.0
        %1360 = vmatpush1.msra.mxu0 0.0
        %1361 = vmatprep.subr.mxu0 0.0
        %1362 = vmatpush1.msra.mxu0 0.0
        %1363 = vmatprep.subr.mxu0 0.0
        %1364 = vmatpush1.msra.mxu0 0.0
        %1365 = vmatprep.subr.mxu0 0.0
        %1366 = vmatpush1.msra.mxu0 0.0
        %1367 = vmatprep.subr.mxu0 0.0
        %1368 = vmatpush1.msra.mxu0 0.0
        %1369 = vmatprep.mubr.f32.mxu0 0.0
        %1370 = vmatmul.mubr.f32.gmra.mrb[0].mxu0 %v1146
        %v1371 = vpop.f32.mrb[0].mxu0
        %v1372 = vadd.f32 %v1295, %v1371
        %v1373 = vpop.f32.mrb[0].mxu0
        %v1374 = vadd.f32 %v1297, %v1373
        %1375 = vmatprep.mubr.f32.mxu0 0.0
        %1376 = vmatmul.mubr.f32.gmra.mrb[0].mxu0 %v1149
        %v1377 = vpop.f32.mrb[0].mxu0
        %v1378 = vadd.f32 %v1301, %v1377
        %v1379 = vpop.f32.mrb[0].mxu0
        %v1380 = vadd.f32 %v1303, %v1379
        %1381 = vdwg.mxu0
        %1382 = vmatprep.subr.mxu0 %v684
        %1383 = vmatpush1.msra.mxu0 %v683
        %1384 = vmatprep.subr.mxu0 %v690
        %1385 = vmatpush1.msra.mxu0 %v689
        %1386 = vmatprep.subr.mxu0 %v696
        %1387 = vmatpush1.msra.mxu0 %v695
        %1388 = vmatprep.subr.mxu0 %v702
        %1389 = vmatpush1.msra.mxu0 %v701
        %1390 = vmatprep.subr.mxu0 %v708
        %1391 = vmatpush1.msra.mxu0 %v707
        %1392 = vmatprep.subr.mxu0 %v714
        %1393 = vmatpush1.msra.mxu0 %v713
        %1394 = vmatprep.subr.mxu0 %v720
        %1395 = vmatpush1.msra.mxu0 %v719
        %1396 = vmatprep.subr.mxu0 %v726
        %1397 = vmatpush1.msra.mxu0 %v725
        %1398 = vmatprep.subr.mxu0 %v732
        %1399 = vmatpush1.msra.mxu0 %v731
        %1400 = vmatprep.subr.mxu0 %v738
        %1401 = vmatpush1.msra.mxu0 %v737
        %1402 = vmatprep.subr.mxu0 %v744
        %1403 = vmatpush1.msra.mxu0 %v743
        %1404 = vmatprep.subr.mxu0 %v750
        %1405 = vmatpush1.msra.mxu0 %v749
        %1406 = vmatprep.subr.mxu0 %v756
        %1407 = vmatpush1.msra.mxu0 %v755
        %1408 = vmatprep.subr.mxu0 %v762
        %1409 = vmatpush1.msra.mxu0 %v761
        %1410 = vmatprep.subr.mxu0 %v768
        %1411 = vmatpush1.msra.mxu0 %v767
        %1412 = vmatprep.subr.mxu0 %v774
        %1413 = vmatpush1.msra.mxu0 %v773
        %1414 = vmatprep.subr.mxu0 %v780
        %1415 = vmatpush1.msra.mxu0 %v779
        %1416 = vmatprep.subr.mxu0 %v786
        %1417 = vmatpush1.msra.mxu0 %v785
        %1418 = vmatprep.subr.mxu0 %v792
        %1419 = vmatpush1.msra.mxu0 %v791
        %1420 = vmatprep.subr.mxu0 %v798
        %1421 = vmatpush1.msra.mxu0 %v797
        %1422 = vmatprep.subr.mxu0 %v804
        %1423 = vmatpush1.msra.mxu0 %v803
        %1424 = vmatprep.subr.mxu0 %v810
        %1425 = vmatpush1.msra.mxu0 %v809
        %1426 = vmatprep.subr.mxu0 %v816
        %1427 = vmatpush1.msra.mxu0 %v815
        %1428 = vmatprep.subr.mxu0 %v822
        %1429 = vmatpush1.msra.mxu0 %v821
        %1430 = vmatprep.subr.mxu0 %v828
        %1431 = vmatpush1.msra.mxu0 %v827
        %1432 = vmatprep.subr.mxu0 %v834
        %1433 = vmatpush1.msra.mxu0 %v833
        %1434 = vmatprep.subr.mxu0 %v840
        %1435 = vmatpush1.msra.mxu0 %v839
        %1436 = vmatprep.subr.mxu0 %v846
        %1437 = vmatpush1.msra.mxu0 %v845
        %1438 = vmatprep.subr.mxu0 %v852
        %1439 = vmatpush1.msra.mxu0 %v851
        %1440 = vmatprep.subr.mxu0 %v858
        %1441 = vmatpush1.msra.mxu0 %v857
        %1442 = vmatprep.subr.mxu0 %v864
        %1443 = vmatpush1.msra.mxu0 %v863
        %1444 = vmatprep.subr.mxu0 %v870
        %1445 = vmatpush1.msra.mxu0 %v869
        %1446 = vmatprep.mubr.f32.mxu0 %v672
        %1447 = vmatmul.mubr.f32.gmra.mrb[0].mxu0 %v671
        %v1448 = vpop.f32.mrb[0].mxu0
        %v1449 = vadd.f32 %v1126, %v1448
        %v1450 = vpop.f32.mrb[0].mxu0
        %v1451 = vadd.f32 %v1130, %v1450
        %1452 = vmatprep.mubr.f32.mxu0 %v677
        %1453 = vmatmul.mubr.f32.gmra.mrb[0].mxu0 %v676
        %v1454 = vpop.f32.mrb[0].mxu0
        %v1455 = vadd.f32 %v1126, %v1454
        %v1456 = vpop.f32.mrb[0].mxu0
        %v1457 = vadd.f32 %v1130, %v1456
        %1458 = vdwg.mxu0
        %1459 = vmatprep.subr.mxu0 %v876
        %1460 = vmatpush1.msra.mxu0 %v875
        %1461 = vmatprep.subr.mxu0 %v882
        %1462 = vmatpush1.msra.mxu0 %v881
        %1463 = vmatprep.subr.mxu0 %v888
        %1464 = vmatpush1.msra.mxu0 %v887
        %1465 = vmatprep.subr.mxu0 %v894
        %1466 = vmatpush1.msra.mxu0 %v893
        %1467 = vmatprep.subr.mxu0 %v900
        %1468 = vmatpush1.msra.mxu0 %v899
        %1469 = vmatprep.subr.mxu0 %v906
        %1470 = vmatpush1.msra.mxu0 %v905
        %1471 = vmatprep.subr.mxu0 %v912
        %1472 = vmatpush1.msra.mxu0 %v911
        %1473 = vmatprep.subr.mxu0 %v918
        %1474 = vmatpush1.msra.mxu0 %v917
        %1475 = vmatprep.subr.mxu0 %v924
        %1476 = vmatpush1.msra.mxu0 %v923
        %1477 = vmatprep.subr.mxu0 %v930
        %1478 = vmatpush1.msra.mxu0 %v929
        %1479 = vmatprep.subr.mxu0 %v936
        %1480 = vmatpush1.msra.mxu0 %v935
        %1481 = vmatprep.subr.mxu0 %v942
        %1482 = vmatpush1.msra.mxu0 %v941
        %1483 = vmatprep.subr.mxu0 %v948
        %1484 = vmatpush1.msra.mxu0 %v947
        %1485 = vmatprep.subr.mxu0 %v954
        %1486 = vmatpush1.msra.mxu0 %v953
        %1487 = vmatprep.subr.mxu0 %v960
        %1488 = vmatpush1.msra.mxu0 %v959
        %1489 = vmatprep.subr.mxu0 %v966
        %1490 = vmatpush1.msra.mxu0 %v965
        %1491 = vmatprep.subr.mxu0 %v972
        %1492 = vmatpush1.msra.mxu0 %v971
        %1493 = vmatprep.subr.mxu0 %v978
        %1494 = vmatpush1.msra.mxu0 %v977
        %1495 = vmatprep.subr.mxu0 %v984
        %1496 = vmatpush1.msra.mxu0 %v983
        %1497 = vmatprep.subr.mxu0 %v990
        %1498 = vmatpush1.msra.mxu0 %v989
        %1499 = vmatprep.subr.mxu0 %v996
        %1500 = vmatpush1.msra.mxu0 %v995
        %1501 = vmatprep.subr.mxu0 %v1002
        %1502 = vmatpush1.msra.mxu0 %v1001
        %1503 = vmatprep.subr.mxu0 %v1008
        %1504 = vmatpush1.msra.mxu0 %v1007
        %1505 = vmatprep.subr.mxu0 %v1014
        %1506 = vmatpush1.msra.mxu0 %v1013
        %1507 = vmatprep.subr.mxu0 %v1020
        %1508 = vmatpush1.msra.mxu0 %v1019
        %1509 = vmatprep.subr.mxu0 %v1026
        %1510 = vmatpush1.msra.mxu0 %v1025
        %1511 = vmatprep.subr.mxu0 %v1032
        %1512 = vmatpush1.msra.mxu0 %v1031
        %1513 = vmatprep.subr.mxu0 %v1038
        %1514 = vmatpush1.msra.mxu0 %v1037
        %1515 = vmatprep.subr.mxu0 %v1044
        %1516 = vmatpush1.msra.mxu0 %v1043
        %1517 = vmatprep.subr.mxu0 %v1050
        %1518 = vmatpush1.msra.mxu0 %v1049
        %1519 = vmatprep.subr.mxu0 %v1056
        %1520 = vmatpush1.msra.mxu0 %v1055
        %1521 = vmatprep.subr.mxu0 %v1062
        %1522 = vmatpush1.msra.mxu0 %v1061
        %1523 = vmatprep.mubr.f32.mxu0 %v674
        %1524 = vmatmul.mubr.f32.gmra.mrb[0].mxu0 %v673
        %v1525 = vpop.f32.mrb[0].mxu0
        %v1526 = vadd.f32 %v1449, %v1525
        %v1527 = vpop.f32.mrb[0].mxu0
        %v1528 = vadd.f32 %v1451, %v1527
        %1529 = vmatprep.mubr.f32.mxu0 %v679
        %1530 = vmatmul.mubr.f32.gmra.mrb[0].mxu0 %v678
        %v1531 = vpop.f32.mrb[0].mxu0
        %v1532 = vadd.f32 %v1455, %v1531
        %v1533 = vpop.f32.mrb[0].mxu0
        %v1534 = vadd.f32 %v1457, %v1533
        %1535 = vdwg.mxu0
        %1536 = vmatprep.subr.mxu0 %v1068
        %1537 = vmatpush1.msra.mxu0 %v1067
        %1538 = vmatprep.subr.mxu0 %v1074
        %1539 = vmatpush1.msra.mxu0 %v1073
        %1540 = vmatprep.subr.mxu0 %v1080
        %1541 = vmatpush1.msra.mxu0 %v1079
        %1542 = vmatprep.subr.mxu0 %v1086
        %1543 = vmatpush1.msra.mxu0 %v1085
        %1544 = vmatprep.subr.mxu0 %v1092
        %1545 = vmatpush1.msra.mxu0 %v1091
        %1546 = vmatprep.subr.mxu0 %v1098
        %1547 = vmatpush1.msra.mxu0 %v1097
        %1548 = vmatprep.subr.mxu0 %v1104
        %1549 = vmatpush1.msra.mxu0 %v1103
        %1550 = vmatprep.subr.mxu0 %v1110
        %1551 = vmatpush1.msra.mxu0 %v1109
        %1552 = vmatprep.subr.mxu0 0.0
        %1553 = vmatpush1.msra.mxu0 0.0
        %1554 = vmatprep.subr.mxu0 0.0
        %1555 = vmatpush1.msra.mxu0 0.0
        %1556 = vmatprep.subr.mxu0 0.0
        %1557 = vmatpush1.msra.mxu0 0.0
        %1558 = vmatprep.subr.mxu0 0.0
        %1559 = vmatpush1.msra.mxu0 0.0
        %1560 = vmatprep.subr.mxu0 0.0
        %1561 = vmatpush1.msra.mxu0 0.0
        %1562 = vmatprep.subr.mxu0 0.0
        %1563 = vmatpush1.msra.mxu0 0.0
        %1564 = vmatprep.subr.mxu0 0.0
        %1565 = vmatpush1.msra.mxu0 0.0
        %1566 = vmatprep.subr.mxu0 0.0
        %1567 = vmatpush1.msra.mxu0 0.0
        %1568 = vmatprep.subr.mxu0 0.0
        %1569 = vmatpush1.msra.mxu0 0.0
        %1570 = vmatprep.subr.mxu0 0.0
        %1571 = vmatpush1.msra.mxu0 0.0
        %1572 = vmatprep.subr.mxu0 0.0
        %1573 = vmatpush1.msra.mxu0 0.0
        %1574 = vmatprep.subr.mxu0 0.0
        %1575 = vmatpush1.msra.mxu0 0.0
        %1576 = vmatprep.subr.mxu0 0.0
        %1577 = vmatpush1.msra.mxu0 0.0
        %1578 = vmatprep.subr.mxu0 0.0
        %1579 = vmatpush1.msra.mxu0 0.0
        %1580 = vmatprep.subr.mxu0 0.0
        %1581 = vmatpush1.msra.mxu0 0.0
        %1582 = vmatprep.subr.mxu0 0.0
        %1583 = vmatpush1.msra.mxu0 0.0
        %1584 = vmatprep.subr.mxu0 0.0
        %1585 = vmatpush1.msra.mxu0 0.0
        %1586 = vmatprep.subr.mxu0 0.0
        %1587 = vmatpush1.msra.mxu0 0.0
        %1588 = vmatprep.subr.mxu0 0.0
        %1589 = vmatpush1.msra.mxu0 0.0
        %1590 = vmatprep.subr.mxu0 0.0
        %1591 = vmatpush1.msra.mxu0 0.0
        %1592 = vmatprep.subr.mxu0 0.0
        %1593 = vmatpush1.msra.mxu0 0.0
        %1594 = vmatprep.subr.mxu0 0.0
        %1595 = vmatpush1.msra.mxu0 0.0
        %1596 = vmatprep.subr.mxu0 0.0
        %1597 = vmatpush1.msra.mxu0 0.0
        %1598 = vmatprep.subr.mxu0 0.0
        %1599 = vmatpush1.msra.mxu0 0.0
        %1600 = vmatprep.mubr.f32.mxu0 0.0
        %1601 = vmatmul.mubr.f32.gmra.mrb[0].mxu0 %v1146
        %v1602 = vpop.f32.mrb[0].mxu0
        %v1603 = vadd.f32 %v1526, %v1602
        %v1604 = vpop.f32.mrb[0].mxu0
        %v1605 = vadd.f32 %v1528, %v1604
        %1606 = vmatprep.mubr.f32.mxu0 0.0
        %1607 = vmatmul.mubr.f32.gmra.mrb[0].mxu0 %v1149
        %v1608 = vpop.f32.mrb[0].mxu0
        %v1609 = vadd.f32 %v1532, %v1608
        %v1610 = vpop.f32.mrb[0].mxu0
        %v1611 = vadd.f32 %v1534, %v1610
        %1612 = vdwg.mxu0
        %1613 = vmatprep.subr.mxu0 %v686
        %1614 = vmatpush1.msra.mxu0 %v685
        %1615 = vmatprep.subr.mxu0 %v692
        %1616 = vmatpush1.msra.mxu0 %v691
        %1617 = vmatprep.subr.mxu0 %v698
        %1618 = vmatpush1.msra.mxu0 %v697
        %1619 = vmatprep.subr.mxu0 %v704
        %1620 = vmatpush1.msra.mxu0 %v703
        %1621 = vmatprep.subr.mxu0 %v710
        %1622 = vmatpush1.msra.mxu0 %v709
        %1623 = vmatprep.subr.mxu0 %v716
        %1624 = vmatpush1.msra.mxu0 %v715
        %1625 = vmatprep.subr.mxu0 %v722
        %1626 = vmatpush1.msra.mxu0 %v721
        %1627 = vmatprep.subr.mxu0 %v728
        %1628 = vmatpush1.msra.mxu0 %v727
        %1629 = vmatprep.subr.mxu0 %v734
        %1630 = vmatpush1.msra.mxu0 %v733
        %1631 = vmatprep.subr.mxu0 %v740
        %1632 = vmatpush1.msra.mxu0 %v739
        %1633 = vmatprep.subr.mxu0 %v746
        %1634 = vmatpush1.msra.mxu0 %v745
        %1635 = vmatprep.subr.mxu0 %v752
        %1636 = vmatpush1.msra.mxu0 %v751
        %1637 = vmatprep.subr.mxu0 %v758
        %1638 = vmatpush1.msra.mxu0 %v757
        %1639 = vmatprep.subr.mxu0 %v764
        %1640 = vmatpush1.msra.mxu0 %v763
        %1641 = vmatprep.subr.mxu0 %v770
        %1642 = vmatpush1.msra.mxu0 %v769
        %1643 = vmatprep.subr.mxu0 %v776
        %1644 = vmatpush1.msra.mxu0 %v775
        %1645 = vmatprep.subr.mxu0 %v782
        %1646 = vmatpush1.msra.mxu0 %v781
        %1647 = vmatprep.subr.mxu0 %v788
        %1648 = vmatpush1.msra.mxu0 %v787
        %1649 = vmatprep.subr.mxu0 %v794
        %1650 = vmatpush1.msra.mxu0 %v793
        %1651 = vmatprep.subr.mxu0 %v800
        %1652 = vmatpush1.msra.mxu0 %v799
        %1653 = vmatprep.subr.mxu0 %v806
        %1654 = vmatpush1.msra.mxu0 %v805
        %1655 = vmatprep.subr.mxu0 %v812
        %1656 = vmatpush1.msra.mxu0 %v811
        %1657 = vmatprep.subr.mxu0 %v818
        %1658 = vmatpush1.msra.mxu0 %v817
        %1659 = vmatprep.subr.mxu0 %v824
        %1660 = vmatpush1.msra.mxu0 %v823
        %1661 = vmatprep.subr.mxu0 %v830
        %1662 = vmatpush1.msra.mxu0 %v829
        %1663 = vmatprep.subr.mxu0 %v836
        %1664 = vmatpush1.msra.mxu0 %v835
        %1665 = vmatprep.subr.mxu0 %v842
        %1666 = vmatpush1.msra.mxu0 %v841
        %1667 = vmatprep.subr.mxu0 %v848
        %1668 = vmatpush1.msra.mxu0 %v847
        %1669 = vmatprep.subr.mxu0 %v854
        %1670 = vmatpush1.msra.mxu0 %v853
        %1671 = vmatprep.subr.mxu0 %v860
        %1672 = vmatpush1.msra.mxu0 %v859
        %1673 = vmatprep.subr.mxu0 %v866
        %1674 = vmatpush1.msra.mxu0 %v865
        %1675 = vmatprep.subr.mxu0 %v872
        %1676 = vmatpush1.msra.mxu0 %v871
        %1677 = vmatprep.mubr.f32.mxu0 %v672
        %1678 = vmatmul.mubr.f32.gmra.mrb[0].mxu0 %v671
        %v1679 = vpop.f32.mrb[0].mxu0
        %v1680 = vadd.f32 %v1134, %v1679
        %v1681 = vpop.f32.mrb[0].mxu0
        %v1682 = vadd.f32 %v1138, %v1681
        %1683 = vmatprep.mubr.f32.mxu0 %v677
        %1684 = vmatmul.mubr.f32.gmra.mrb[0].mxu0 %v676
        %v1685 = vpop.f32.mrb[0].mxu0
        %v1686 = vadd.f32 %v1134, %v1685
        %v1687 = vpop.f32.mrb[0].mxu0
        %v1688 = vadd.f32 %v1138, %v1687
        %1689 = vdwg.mxu0
        %1690 = vmatprep.subr.mxu0 %v878
        %1691 = vmatpush1.msra.mxu0 %v877
        %1692 = vmatprep.subr.mxu0 %v884
        %1693 = vmatpush1.msra.mxu0 %v883
        %1694 = vmatprep.subr.mxu0 %v890
        %1695 = vmatpush1.msra.mxu0 %v889
        %1696 = vmatprep.subr.mxu0 %v896
        %1697 = vmatpush1.msra.mxu0 %v895
        %1698 = vmatprep.subr.mxu0 %v902
        %1699 = vmatpush1.msra.mxu0 %v901
        %1700 = vmatprep.subr.mxu0 %v908
        %1701 = vmatpush1.msra.mxu0 %v907
        %1702 = vmatprep.subr.mxu0 %v914
        %1703 = vmatpush1.msra.mxu0 %v913
        %1704 = vmatprep.subr.mxu0 %v920
        %1705 = vmatpush1.msra.mxu0 %v919
        %1706 = vmatprep.subr.mxu0 %v926
        %1707 = vmatpush1.msra.mxu0 %v925
        %1708 = vmatprep.subr.mxu0 %v932
        %1709 = vmatpush1.msra.mxu0 %v931
        %1710 = vmatprep.subr.mxu0 %v938
        %1711 = vmatpush1.msra.mxu0 %v937
        %1712 = vmatprep.subr.mxu0 %v944
        %1713 = vmatpush1.msra.mxu0 %v943
        %1714 = vmatprep.subr.mxu0 %v950
        %1715 = vmatpush1.msra.mxu0 %v949
        %1716 = vmatprep.subr.mxu0 %v956
        %1717 = vmatpush1.msra.mxu0 %v955
        %1718 = vmatprep.subr.mxu0 %v962
        %1719 = vmatpush1.msra.mxu0 %v961
        %1720 = vmatprep.subr.mxu0 %v968
        %1721 = vmatpush1.msra.mxu0 %v967
        %1722 = vmatprep.subr.mxu0 %v974
        %1723 = vmatpush1.msra.mxu0 %v973
        %1724 = vmatprep.subr.mxu0 %v980
        %1725 = vmatpush1.msra.mxu0 %v979
        %1726 = vmatprep.subr.mxu0 %v986
        %1727 = vmatpush1.msra.mxu0 %v985
        %1728 = vmatprep.subr.mxu0 %v992
        %1729 = vmatpush1.msra.mxu0 %v991
        %1730 = vmatprep.subr.mxu0 %v998
        %1731 = vmatpush1.msra.mxu0 %v997
        %1732 = vmatprep.subr.mxu0 %v1004
        %1733 = vmatpush1.msra.mxu0 %v1003
        %1734 = vmatprep.subr.mxu0 %v1010
        %1735 = vmatpush1.msra.mxu0 %v1009
        %1736 = vmatprep.subr.mxu0 %v1016
        %1737 = vmatpush1.msra.mxu0 %v1015
        %1738 = vmatprep.subr.mxu0 %v1022
        %1739 = vmatpush1.msra.mxu0 %v1021
        %1740 = vmatprep.subr.mxu0 %v1028
        %1741 = vmatpush1.msra.mxu0 %v1027
        %1742 = vmatprep.subr.mxu0 %v1034
        %1743 = vmatpush1.msra.mxu0 %v1033
        %1744 = vmatprep.subr.mxu0 %v1040
        %1745 = vmatpush1.msra.mxu0 %v1039
        %1746 = vmatprep.subr.mxu0 %v1046
        %1747 = vmatpush1.msra.mxu0 %v1045
        %1748 = vmatprep.subr.mxu0 %v1052
        %1749 = vmatpush1.msra.mxu0 %v1051
        %1750 = vmatprep.subr.mxu0 %v1058
        %1751 = vmatpush1.msra.mxu0 %v1057
        %1752 = vmatprep.subr.mxu0 %v1064
        %1753 = vmatpush1.msra.mxu0 %v1063
        %1754 = vmatprep.mubr.f32.mxu0 %v674
        %1755 = vmatmul.mubr.f32.gmra.mrb[0].mxu0 %v673
        %v1756 = vpop.f32.mrb[0].mxu0
        %v1757 = vadd.f32 %v1680, %v1756
        %v1758 = vpop.f32.mrb[0].mxu0
        %v1759 = vadd.f32 %v1682, %v1758
        %1760 = vmatprep.mubr.f32.mxu0 %v679
        %1761 = vmatmul.mubr.f32.gmra.mrb[0].mxu0 %v678
        %v1762 = vpop.f32.mrb[0].mxu0
        %v1763 = vadd.f32 %v1686, %v1762
        %v1764 = vpop.f32.mrb[0].mxu0
        %v1765 = vadd.f32 %v1688, %v1764
        %1766 = vdwg.mxu0
        %1767 = vmatprep.subr.mxu0 %v1070
        %1768 = vmatpush1.msra.mxu0 %v1069
        %1769 = vmatprep.subr.mxu0 %v1076
        %1770 = vmatpush1.msra.mxu0 %v1075
        %1771 = vmatprep.subr.mxu0 %v1082
        %1772 = vmatpush1.msra.mxu0 %v1081
        %1773 = vmatprep.subr.mxu0 %v1088
        %1774 = vmatpush1.msra.mxu0 %v1087
        %1775 = vmatprep.subr.mxu0 %v1094
        %1776 = vmatpush1.msra.mxu0 %v1093
        %1777 = vmatprep.subr.mxu0 %v1100
        %1778 = vmatpush1.msra.mxu0 %v1099
        %1779 = vmatprep.subr.mxu0 %v1106
        %1780 = vmatpush1.msra.mxu0 %v1105
        %1781 = vmatprep.subr.mxu0 %v1112
        %1782 = vmatpush1.msra.mxu0 %v1111
        %1783 = vmatprep.subr.mxu0 0.0
        %1784 = vmatpush1.msra.mxu0 0.0
        %1785 = vmatprep.subr.mxu0 0.0
        %1786 = vmatpush1.msra.mxu0 0.0
        %1787 = vmatprep.subr.mxu0 0.0
        %1788 = vmatpush1.msra.mxu0 0.0
        %1789 = vmatprep.subr.mxu0 0.0
        %1790 = vmatpush1.msra.mxu0 0.0
        %1791 = vmatprep.subr.mxu0 0.0
        %1792 = vmatpush1.msra.mxu0 0.0
        %1793 = vmatprep.subr.mxu0 0.0
        %1794 = vmatpush1.msra.mxu0 0.0
        %1795 = vmatprep.subr.mxu0 0.0
        %1796 = vmatpush1.msra.mxu0 0.0
        %1797 = vmatprep.subr.mxu0 0.0
        %1798 = vmatpush1.msra.mxu0 0.0
        %1799 = vmatprep.subr.mxu0 0.0
        %1800 = vmatpush1.msra.mxu0 0.0
        %1801 = vmatprep.subr.mxu0 0.0
        %1802 = vmatpush1.msra.mxu0 0.0
        %1803 = vmatprep.subr.mxu0 0.0
        %1804 = vmatpush1.msra.mxu0 0.0
        %1805 = vmatprep.subr.mxu0 0.0
        %1806 = vmatpush1.msra.mxu0 0.0
        %1807 = vmatprep.subr.mxu0 0.0
        %1808 = vmatpush1.msra.mxu0 0.0
        %1809 = vmatprep.subr.mxu0 0.0
        %1810 = vmatpush1.msra.mxu0 0.0
        %1811 = vmatprep.subr.mxu0 0.0
        %1812 = vmatpush1.msra.mxu0 0.0
        %1813 = vmatprep.subr.mxu0 0.0
        %1814 = vmatpush1.msra.mxu0 0.0
        %1815 = vmatprep.subr.mxu0 0.0
        %1816 = vmatpush1.msra.mxu0 0.0
        %1817 = vmatprep.subr.mxu0 0.0
        %1818 = vmatpush1.msra.mxu0 0.0
        %1819 = vmatprep.subr.mxu0 0.0
        %1820 = vmatpush1.msra.mxu0 0.0
        %1821 = vmatprep.subr.mxu0 0.0
        %1822 = vmatpush1.msra.mxu0 0.0
        %1823 = vmatprep.subr.mxu0 0.0
        %1824 = vmatpush1.msra.mxu0 0.0
        %1825 = vmatprep.subr.mxu0 0.0
        %1826 = vmatpush1.msra.mxu0 0.0
        %1827 = vmatprep.subr.mxu0 0.0
        %1828 = vmatpush1.msra.mxu0 0.0
        %1829 = vmatprep.subr.mxu0 0.0
        %1830 = vmatpush1.msra.mxu0 0.0
        %1831 = vmatprep.mubr.f32.mxu0 0.0
        %1832 = vmatmul.mubr.f32.gmra.mrb[0].mxu0 %v1146
        %v1833 = vpop.f32.mrb[0].mxu0
        %v1834 = vadd.f32 %v1757, %v1833
        %v1835 = vpop.f32.mrb[0].mxu0
        %v1836 = vadd.f32 %v1759, %v1835
        %1837 = vmatprep.mubr.f32.mxu0 0.0
        %1838 = vmatmul.mubr.f32.gmra.mrb[0].mxu0 %v1149
        %v1839 = vpop.f32.mrb[0].mxu0
        %v1840 = vadd.f32 %v1763, %v1839
        %v1841 = vpop.f32.mrb[0].mxu0
        %v1842 = vadd.f32 %v1765, %v1841
        %1843 = vdwg.mxu0
        %v1844 = vmax.f32 %v1372, 0.0
        %v1845 = vmax.f32 %v1374, 0.0
        %v1846 = vmax.f32 %v1603, 0.0
        %v1847 = vmax.f32 %v1605, 0.0
        %v1848 = vmax.f32 %v1834, 0.0
        %v1849 = vmax.f32 %v1836, 0.0
        %v1850 = vmax.f32 %v1378, 0.0
        %v1851 = vmax.f32 %v1380, 0.0
        %v1852 = vmax.f32 %v1609, 0.0
        %v1853 = vmax.f32 %v1611, 0.0
        %v1854 = vmax.f32 %v1840, 0.0
        %v1855 = vmax.f32 %v1842, 0.0
        %v1856 = vld [vmem:[%s3] sm:$0xff]
        %v1857 = vld [vmem:[%s3 + $0x8] sm:$0xff]
        %v1858 = vld [vmem:[%s3 + $0x10] sm:$0xff]
        %v1859 = vld [vmem:[%s3 + $0x18] sm:$0xff]
        %v1860 = vld [vmem:[%s3 + $0x20] sm:$0xff]
        %v1861 = vld [vmem:[%s3 + $0x28] sm:$0xff]
        %v1862 = vld [vmem:[%s3 + $0x30] sm:$0xff]
        %v1863 = vld [vmem:[%s3 + $0x38] sm:$0xff]
        %v1864 = vld [vmem:[%s3 + $0x40] sm:$0xff]
        %v1865 = vld [vmem:[%s3 + $0x48] sm:$0xff]
        %v1866 = vld [vmem:[%s3 + $0x50] sm:$0xff]
        %v1867 = vld [vmem:[%s3 + $0x58] sm:$0xff]
        %v1868 = vld [vmem:[%s3 + $0x60] sm:$0xff]
        %v1869 = vld [vmem:[%s3 + $0x68] sm:$0xff]
        %v1870 = vld [vmem:[%s3 + $0x70] sm:$0xff]
        %v1871 = vld [vmem:[%s3 + $0x78] sm:$0xff]
        %v1872 = vld [vmem:[%s3 + $0x80] sm:$0xff]
        %v1873 = vld [vmem:[%s3 + $0x88] sm:$0xff]
        %v1874 = vld [vmem:[%s3 + $0x90] sm:$0xff]
        %v1875 = vld [vmem:[%s3 + $0x98] sm:$0xff]
        %v1876 = vld [vmem:[%s3 + $0xa0] sm:$0xff]
        %v1877 = vld [vmem:[%s3 + $0xa8] sm:$0xff]
        %v1878 = vld [vmem:[%s3 + $0xb0] sm:$0xff]
        %v1879 = vld [vmem:[%s3 + $0xb8] sm:$0xff]
        %v1880 = vld [vmem:[%s3 + $0xc0] sm:$0xff]
        %v1881 = vld [vmem:[%s3 + $0xc8] sm:$0xff]
        %v1882 = vld [vmem:[%s3 + $0xd0] sm:$0xff]
        %v1883 = vld [vmem:[%s3 + $0xd8] sm:$0xff]
        %v1884 = vld [vmem:[%s3 + $0xe0] sm:$0xff]
        %v1885 = vld [vmem:[%s3 + $0xe8] sm:$0xff]
        %v1886 = vld [vmem:[%s3 + $0xf0] sm:$0xff]
        %v1887 = vld [vmem:[%s3 + $0xf8] sm:$0xff]
        %v1888 = vld [vmem:[%s3 + $0x100] sm:$0xff]
        %v1889 = vld [vmem:[%s3 + $0x108] sm:$0xff]
        %v1890 = vld [vmem:[%s3 + $0x110] sm:$0xff]
        %v1891 = vld [vmem:[%s3 + $0x118] sm:$0xff]
        %v1892 = vld [vmem:[%s3 + $0x120] sm:$0xff]
        %v1893 = vld [vmem:[%s3 + $0x128] sm:$0xff]
        %v1894 = vld [vmem:[%s3 + $0x130] sm:$0xff]
        %v1895 = vld [vmem:[%s3 + $0x138] sm:$0xff]
        %v1896 = vld [vmem:[%s3 + $0x140] sm:$0xff]
        %v1897 = vld [vmem:[%s3 + $0x148] sm:$0xff]
        %v1898 = vld [vmem:[%s3 + $0x150] sm:$0xff]
        %v1899 = vld [vmem:[%s3 + $0x158] sm:$0xff]
        %v1900 = vld [vmem:[%s3 + $0x160] sm:$0xff]
        %v1901 = vld [vmem:[%s3 + $0x168] sm:$0xff]
        %v1902 = vld [vmem:[%s3 + $0x170] sm:$0xff]
        %v1903 = vld [vmem:[%s3 + $0x178] sm:$0xff]
        %v1904 = vld [vmem:[%s3 + $0x180] sm:$0xff]
        %v1905 = vld [vmem:[%s3 + $0x188] sm:$0xff]
        %v1906 = vld [vmem:[%s3 + $0x190] sm:$0xff]
        %v1907 = vld [vmem:[%s3 + $0x198] sm:$0xff]
        %v1908 = vld [vmem:[%s3 + $0x1a0] sm:$0xff]
        %v1909 = vld [vmem:[%s3 + $0x1a8] sm:$0xff]
        %v1910 = vld [vmem:[%s3 + $0x1b0] sm:$0xff]
        %v1911 = vld [vmem:[%s3 + $0x1b8] sm:$0xff]
        %v1912 = vld [vmem:[%s3 + $0x1c0] sm:$0xff]
        %v1913 = vld [vmem:[%s3 + $0x1c8] sm:$0xff]
        %v1914 = vld [vmem:[%s3 + $0x1d0] sm:$0xff]
        %v1915 = vld [vmem:[%s3 + $0x1d8] sm:$0xff]
        %v1916 = vld [vmem:[%s3 + $0x1e0] sm:$0xff]
        %v1917 = vld [vmem:[%s3 + $0x1e8] sm:$0xff]
        %v1918 = vld [vmem:[%s3 + $0x1f0] sm:$0xff]
        %v1919 = vld [vmem:[%s3 + $0x1f8] sm:$0xff]
        %v1920 = vld [vmem:[%s3 + $0x200] sm:$0xff]
        %v1921 = vld [vmem:[%s3 + $0x208] sm:$0xff]
        %v1922 = vld [vmem:[%s3 + $0x210] sm:$0xff]
        %v1923 = vld [vmem:[%s3 + $0x218] sm:$0xff]
        %v1924 = vld [vmem:[%s3 + $0x220] sm:$0xff]
        %v1925 = vld [vmem:[%s3 + $0x228] sm:$0xff]
        %v1926 = vld [vmem:[%s3 + $0x230] sm:$0xff]
        %v1927 = vld [vmem:[%s3 + $0x238] sm:$0xff]
        %v1928 = vld [vmem:[%s3 + $0x240] sm:$0xff]
        %v1929 = vld [vmem:[%s3 + $0x248] sm:$0xff]
        %v1930 = vld [vmem:[%s3 + $0x250] sm:$0xff]
        %v1931 = vld [vmem:[%s3 + $0x258] sm:$0xff]
        %v1932 = vld [vmem:[%s3 + $0x260] sm:$0xff]
        %v1933 = vld [vmem:[%s3 + $0x268] sm:$0xff]
        %v1934 = vld [vmem:[%s3 + $0x270] sm:$0xff]
        %v1935 = vld [vmem:[%s3 + $0x278] sm:$0xff]
        %v1936 = vld [vmem:[%s3 + $0x280] sm:$0xff]
        %v1937 = vld [vmem:[%s3 + $0x288] sm:$0xff]
        %v1938 = vld [vmem:[%s3 + $0x290] sm:$0xff]
        %v1939 = vld [vmem:[%s3 + $0x298] sm:$0xff]
        %v1940 = vld [vmem:[%s3 + $0x2a0] sm:$0xff]
        %v1941 = vld [vmem:[%s3 + $0x2a8] sm:$0xff]
        %v1942 = vld [vmem:[%s3 + $0x2b0] sm:$0xff]
        %v1943 = vld [vmem:[%s3 + $0x2b8] sm:$0xff]
        %v1944 = vld [vmem:[#allocation11] sm:$0x1]
        %v1946 = vlaneseq
        %v1947 = vshrl.u32 %v1946, 7
        %v1948 = vsub.s32 0, %v1947
        %v1949 = vrot.slane %v1944, %v1948
        %v1952 = vsel %vm435, %v1849, 0
        %v1955 = vsel %vm435, %v1855, 0
        %1957 = vmatprep.subr.mxu0 0.0
        %1958 = vmatpush1.msra.mxu0 %v1856
        %1959 = vmatprep.subr.mxu0 0.0
        %1960 = vmatpush1.msra.mxu0 %v1857
        %1961 = vmatprep.subr.mxu0 0.0
        %1962 = vmatpush1.msra.mxu0 %v1858
        %1963 = vmatprep.subr.mxu0 0.0
        %1964 = vmatpush1.msra.mxu0 %v1859
        %1965 = vmatprep.subr.mxu0 0.0
        %1966 = vmatpush1.msra.mxu0 %v1860
        %1967 = vmatprep.subr.mxu0 0.0
        %1968 = vmatpush1.msra.mxu0 %v1861
        %1969 = vmatprep.subr.mxu0 0.0
        %1970 = vmatpush1.msra.mxu0 %v1862
        %1971 = vmatprep.subr.mxu0 0.0
        %1972 = vmatpush1.msra.mxu0 %v1863
        %1973 = vmatprep.subr.mxu0 0.0
        %1974 = vmatpush1.msra.mxu0 %v1864
        %1975 = vmatprep.subr.mxu0 0.0
        %1976 = vmatpush1.msra.mxu0 %v1865
        %1977 = vmatprep.subr.mxu0 0.0
        %1978 = vmatpush1.msra.mxu0 %v1866
        %1979 = vmatprep.subr.mxu0 0.0
        %1980 = vmatpush1.msra.mxu0 %v1867
        %1981 = vmatprep.subr.mxu0 0.0
        %1982 = vmatpush1.msra.mxu0 %v1868
        %1983 = vmatprep.subr.mxu0 0.0
        %1984 = vmatpush1.msra.mxu0 %v1869
        %1985 = vmatprep.subr.mxu0 0.0
        %1986 = vmatpush1.msra.mxu0 %v1870
        %1987 = vmatprep.subr.mxu0 0.0
        %1988 = vmatpush1.msra.mxu0 %v1871
        %1989 = vmatprep.subr.mxu0 0.0
        %1990 = vmatpush1.msra.mxu0 %v1872
        %1991 = vmatprep.subr.mxu0 0.0
        %1992 = vmatpush1.msra.mxu0 %v1873
        %1993 = vmatprep.subr.mxu0 0.0
        %1994 = vmatpush1.msra.mxu0 %v1874
        %1995 = vmatprep.subr.mxu0 0.0
        %1996 = vmatpush1.msra.mxu0 %v1875
        %1997 = vmatprep.subr.mxu0 0.0
        %1998 = vmatpush1.msra.mxu0 %v1876
        %1999 = vmatprep.subr.mxu0 0.0
        %2000 = vmatpush1.msra.mxu0 %v1877
        %2001 = vmatprep.subr.mxu0 0.0
        %2002 = vmatpush1.msra.mxu0 %v1878
        %2003 = vmatprep.subr.mxu0 0.0
        %2004 = vmatpush1.msra.mxu0 %v1879
        %2005 = vmatprep.subr.mxu0 0.0
        %2006 = vmatpush1.msra.mxu0 %v1880
        %2007 = vmatprep.subr.mxu0 0.0
        %2008 = vmatpush1.msra.mxu0 %v1881
        %2009 = vmatprep.subr.mxu0 0.0
        %2010 = vmatpush1.msra.mxu0 %v1882
        %2011 = vmatprep.subr.mxu0 0.0
        %2012 = vmatpush1.msra.mxu0 %v1883
        %2013 = vmatprep.subr.mxu0 0.0
        %2014 = vmatpush1.msra.mxu0 %v1884
        %2015 = vmatprep.subr.mxu0 0.0
        %2016 = vmatpush1.msra.mxu0 %v1885
        %2017 = vmatprep.subr.mxu0 0.0
        %2018 = vmatpush1.msra.mxu0 %v1886
        %2019 = vmatprep.subr.mxu0 0.0
        %2020 = vmatpush1.msra.mxu0 %v1887
        %2021 = vmatprep.mubr.f32.mxu0 %v1845
        %2022 = vmatmul.mubr.f32.gmra.mrb[0].mxu0 %v1844
        %v2023 = vpop.f32.mrb[0].mxu0
        %v2024 = vadd.f32 %v1949, %v2023
        %v2025 = vpop.f32.mrb[0].mxu0
        %2026 = vmatprep.mubr.f32.mxu0 %v1851
        %2027 = vmatmul.mubr.f32.gmra.mrb[0].mxu0 %v1850
        %v2028 = vpop.f32.mrb[0].mxu0
        %v2029 = vadd.f32 %v1949, %v2028
        %v2030 = vpop.f32.mrb[0].mxu0
        %2031 = vdwg.mxu0
        %2032 = vmatprep.subr.mxu0 0.0
        %2033 = vmatpush1.msra.mxu0 %v1888
        %2034 = vmatprep.subr.mxu0 0.0
        %2035 = vmatpush1.msra.mxu0 %v1889
        %2036 = vmatprep.subr.mxu0 0.0
        %2037 = vmatpush1.msra.mxu0 %v1890
        %2038 = vmatprep.subr.mxu0 0.0
        %2039 = vmatpush1.msra.mxu0 %v1891
        %2040 = vmatprep.subr.mxu0 0.0
        %2041 = vmatpush1.msra.mxu0 %v1892
        %2042 = vmatprep.subr.mxu0 0.0
        %2043 = vmatpush1.msra.mxu0 %v1893
        %2044 = vmatprep.subr.mxu0 0.0
        %2045 = vmatpush1.msra.mxu0 %v1894
        %2046 = vmatprep.subr.mxu0 0.0
        %2047 = vmatpush1.msra.mxu0 %v1895
        %2048 = vmatprep.subr.mxu0 0.0
        %2049 = vmatpush1.msra.mxu0 %v1896
        %2050 = vmatprep.subr.mxu0 0.0
        %2051 = vmatpush1.msra.mxu0 %v1897
        %2052 = vmatprep.subr.mxu0 0.0
        %2053 = vmatpush1.msra.mxu0 %v1898
        %2054 = vmatprep.subr.mxu0 0.0
        %2055 = vmatpush1.msra.mxu0 %v1899
        %2056 = vmatprep.subr.mxu0 0.0
        %2057 = vmatpush1.msra.mxu0 %v1900
        %2058 = vmatprep.subr.mxu0 0.0
        %2059 = vmatpush1.msra.mxu0 %v1901
        %2060 = vmatprep.subr.mxu0 0.0
        %2061 = vmatpush1.msra.mxu0 %v1902
        %2062 = vmatprep.subr.mxu0 0.0
        %2063 = vmatpush1.msra.mxu0 %v1903
        %2064 = vmatprep.subr.mxu0 0.0
        %2065 = vmatpush1.msra.mxu0 %v1904
        %2066 = vmatprep.subr.mxu0 0.0
        %2067 = vmatpush1.msra.mxu0 %v1905
        %2068 = vmatprep.subr.mxu0 0.0
        %2069 = vmatpush1.msra.mxu0 %v1906
        %2070 = vmatprep.subr.mxu0 0.0
        %2071 = vmatpush1.msra.mxu0 %v1907
        %2072 = vmatprep.subr.mxu0 0.0
        %2073 = vmatpush1.msra.mxu0 %v1908
        %2074 = vmatprep.subr.mxu0 0.0
        %2075 = vmatpush1.msra.mxu0 %v1909
        %2076 = vmatprep.subr.mxu0 0.0
        %2077 = vmatpush1.msra.mxu0 %v1910
        %2078 = vmatprep.subr.mxu0 0.0
        %2079 = vmatpush1.msra.mxu0 %v1911
        %2080 = vmatprep.subr.mxu0 0.0
        %2081 = vmatpush1.msra.mxu0 %v1912
        %2082 = vmatprep.subr.mxu0 0.0
        %2083 = vmatpush1.msra.mxu0 %v1913
        %2084 = vmatprep.subr.mxu0 0.0
        %2085 = vmatpush1.msra.mxu0 %v1914
        %2086 = vmatprep.subr.mxu0 0.0
        %2087 = vmatpush1.msra.mxu0 %v1915
        %2088 = vmatprep.subr.mxu0 0.0
        %2089 = vmatpush1.msra.mxu0 %v1916
        %2090 = vmatprep.subr.mxu0 0.0
        %2091 = vmatpush1.msra.mxu0 %v1917
        %2092 = vmatprep.subr.mxu0 0.0
        %2093 = vmatpush1.msra.mxu0 %v1918
        %2094 = vmatprep.subr.mxu0 0.0
        %2095 = vmatpush1.msra.mxu0 %v1919
        %2096 = vmatprep.mubr.f32.mxu0 %v1847
        %2097 = vmatmul.mubr.f32.gmra.mrb[0].mxu0 %v1846
        %v2098 = vpop.f32.mrb[0].mxu0
        %v2099 = vadd.f32 %v2024, %v2098
        %v2100 = vpop.f32.mrb[0].mxu0
        %2101 = vmatprep.mubr.f32.mxu0 %v1853
        %2102 = vmatmul.mubr.f32.gmra.mrb[0].mxu0 %v1852
        %v2103 = vpop.f32.mrb[0].mxu0
        %v2104 = vadd.f32 %v2029, %v2103
        %v2105 = vpop.f32.mrb[0].mxu0
        %2106 = vdwg.mxu0
        %2107 = vmatprep.subr.mxu0 0.0
        %2108 = vmatpush1.msra.mxu0 %v1920
        %2109 = vmatprep.subr.mxu0 0.0
        %2110 = vmatpush1.msra.mxu0 %v1921
        %2111 = vmatprep.subr.mxu0 0.0
        %2112 = vmatpush1.msra.mxu0 %v1922
        %2113 = vmatprep.subr.mxu0 0.0
        %2114 = vmatpush1.msra.mxu0 %v1923
        %2115 = vmatprep.subr.mxu0 0.0
        %2116 = vmatpush1.msra.mxu0 %v1924
        %2117 = vmatprep.subr.mxu0 0.0
        %2118 = vmatpush1.msra.mxu0 %v1925
        %2119 = vmatprep.subr.mxu0 0.0
        %2120 = vmatpush1.msra.mxu0 %v1926
        %2121 = vmatprep.subr.mxu0 0.0
        %2122 = vmatpush1.msra.mxu0 %v1927
        %2123 = vmatprep.subr.mxu0 0.0
        %2124 = vmatpush1.msra.mxu0 %v1928
        %2125 = vmatprep.subr.mxu0 0.0
        %2126 = vmatpush1.msra.mxu0 %v1929
        %2127 = vmatprep.subr.mxu0 0.0
        %2128 = vmatpush1.msra.mxu0 %v1930
        %2129 = vmatprep.subr.mxu0 0.0
        %2130 = vmatpush1.msra.mxu0 %v1931
        %2131 = vmatprep.subr.mxu0 0.0
        %2132 = vmatpush1.msra.mxu0 %v1932
        %2133 = vmatprep.subr.mxu0 0.0
        %2134 = vmatpush1.msra.mxu0 %v1933
        %2135 = vmatprep.subr.mxu0 0.0
        %2136 = vmatpush1.msra.mxu0 %v1934
        %2137 = vmatprep.subr.mxu0 0.0
        %2138 = vmatpush1.msra.mxu0 %v1935
        %2139 = vmatprep.subr.mxu0 0.0
        %2140 = vmatpush1.msra.mxu0 %v1936
        %2141 = vmatprep.subr.mxu0 0.0
        %2142 = vmatpush1.msra.mxu0 %v1937
        %2143 = vmatprep.subr.mxu0 0.0
        %2144 = vmatpush1.msra.mxu0 %v1938
        %2145 = vmatprep.subr.mxu0 0.0
        %2146 = vmatpush1.msra.mxu0 %v1939
        %2147 = vmatprep.subr.mxu0 0.0
        %2148 = vmatpush1.msra.mxu0 %v1940
        %2149 = vmatprep.subr.mxu0 0.0
        %2150 = vmatpush1.msra.mxu0 %v1941
        %2151 = vmatprep.subr.mxu0 0.0
        %2152 = vmatpush1.msra.mxu0 %v1942
        %2153 = vmatprep.subr.mxu0 0.0
        %2154 = vmatpush1.msra.mxu0 %v1943
        %2155 = vmatprep.subr.mxu0 0.0
        %2156 = vmatpush1.msra.mxu0 0.0
        %2157 = vmatprep.subr.mxu0 0.0
        %2158 = vmatpush1.msra.mxu0 0.0
        %2159 = vmatprep.subr.mxu0 0.0
        %2160 = vmatpush1.msra.mxu0 0.0
        %2161 = vmatprep.subr.mxu0 0.0
        %2162 = vmatpush1.msra.mxu0 0.0
        %2163 = vmatprep.subr.mxu0 0.0
        %2164 = vmatpush1.msra.mxu0 0.0
        %2165 = vmatprep.subr.mxu0 0.0
        %2166 = vmatpush1.msra.mxu0 0.0
        %2167 = vmatprep.subr.mxu0 0.0
        %2168 = vmatpush1.msra.mxu0 0.0
        %2169 = vmatprep.subr.mxu0 0.0
        %2170 = vmatpush1.msra.mxu0 0.0
        %2171 = vmatprep.mubr.f32.mxu0 %v1952
        %2172 = vmatmul.mubr.f32.gmra.mrb[0].mxu0 %v1848
        %v2173 = vpop.f32.mrb[0].mxu0
        %v2174 = vadd.f32 %v2099, %v2173
        %v2175 = vpop.f32.mrb[0].mxu0
        %2176 = vmatprep.mubr.f32.mxu0 %v1955
        %2177 = vmatmul.mubr.f32.gmra.mrb[0].mxu0 %v1854
        %v2178 = vpop.f32.mrb[0].mxu0
        %v2179 = vadd.f32 %v2104, %v2178
        %v2180 = vpop.f32.mrb[0].mxu0
        %2181 = vdwg.mxu0
        %vm2182 = vcmask 261120
        %2183 = vst.msk [vmem:[%s363] sm:$0xff] %vm2182, %v2174
        %2184 = vst.msk [vmem:[%s363 + $0x8] sm:$0xff] %vm2182, %v2179
        %s2185 = sand.u32 %s187, 1
        %s2186 = scalar_lea.sflag [#allocation4], %s2185
        %s2187 = sand.u32 %s187, 1
        %s2188 = smul.addr %s2187, 16
        %s2189 = scalar_lea.vmem [#allocation13], %s2188
        // Predicated region
        $region73: #{tpu_custom_call.1} parent=47 // pred_check
          %p2190 = pneg %p197
        $region74: #{tpu_custom_call.1} parent=47 // pred_check_branch
          %2192 = sbr.rel (%p2190) target = $region76
        $region75: #{tpu_custom_call.1} parent=47 // pred_region
          %s2193 = smul.u32 2, %s27
          %s2195 = ssub.s32 256, 256
          %2196 = vsyncadd %s2186, %s2195
          %s2197 = smul.addr %s2193, 128
          %s2198 = scalar_lea.hbm %s7, %s2197
          %s2199 = sshll.u32 %s2189, 4
          %s2200 = int_to_ptr.vmem [resolvable:$true] %s2199
          %2205 = dma.vmem_to_hbm [thread:$0]  %s2200, 256, %s2198, %s2186, 128, 128, 8
        $region76: #{tpu_custom_call.1} parent=47 // pred_fallthru
          _
      $region48: #{tpu_custom_call.1} parent=5 // pred_fallthru
        _
      %p2206 = scmp.le.s32.totalorder 2, %s22
      // Predicated region
      $region77: #{tpu_custom_call.1} parent=5 // pred_check
        %p2207 = pneg %p2206
      $region78: #{tpu_custom_call.1} parent=5 // pred_check_branch
        %2209 = sbr.rel (%p2207) target = $region80
      $region79: #{tpu_custom_call.1} parent=5 // pred_region
        %s2210 = ssub.s32 %s22, 2
        // Predicated region
        $region81: #{tpu_custom_call.1} parent=79 // pred_check
          %p2211 = pneg %p203
        $region82: #{tpu_custom_call.1} parent=79 // pred_check_branch
          %2213 = sbr.rel (%p2211) target = $region84
        $region83: #{tpu_custom_call.1} parent=79 // pred_region
          %s2214 = sand.u32 %s188, 1
          %s2215 = scalar_lea.sflag [#allocation4], %s2214
          %s2216 = sand.u32 %s188, 1
          %s2217 = smul.addr %s2216, 16
          %s2218 = scalar_lea.vmem [#allocation13], %s2217
          %2219 = dma.done %s2215, 256
        $region84: #{tpu_custom_call.1} parent=79 // pred_fallthru
          _
      $region80: #{tpu_custom_call.1} parent=5 // pred_fallthru
        _
    $region6: #{tpu_custom_call.1} parent=1 // loop_footer
      %s26 = sadd.s32 1, %s22
    $region7: #{tpu_custom_call.1} parent=1 // loop_footer_branch
      %21 = sbr.rel target = $region3
    $region8: #{tpu_custom_call.1} parent=1 // loop_exit
      _
    %2220 = vsyncpa [#allocation3], 1
    %s2221 = scalar_lea.sflag [#allocation3], 1
    %2222 = vsyncpa %s2221, 1
    %2223 = vsyncpa [#allocation6], 1
    %2224 = vsyncpa [#allocation9], 1
    %2225 = vsyncpa [#allocation12], 1
    %2226 = vsyncpa [#allocation4], 1
    %s2227 = scalar_lea.sflag [#allocation4], 1
    %2228 = vsyncpa %s2227, 1

</llo_original>
